<compile_context>
chip_gen: v5e
topology: v5e:2x2
jax: 0.10.0
libtpu: 0.0.40
codegen_flags: <defaults>
</compile_context>

<pallas_src>
import jax
import jax.numpy as jnp
from jax.experimental import pallas as pl
from jax.experimental.pallas import tpu as pltpu


def _round_up(a: int, b: int) -> int:
    return ((a + b - 1) // b) * b


def _pe2d_kernel(idx_ref, x_ref, table_ref, o_ref):
    """Per-tile: gather fused positional embedding rows (one-hot matmul) + add.

    idx_ref   : (tq, 2) int32   col 0 = x-index in [0, max_len)
                                col 1 = max_len + y-index in [max_len, 2*max_len)
    x_ref     : (tq, dim)
    table_ref : (2*max_len, dim) block-diagonal fused table [[Tx, 0], [0, Ty]]
    o_ref     : (tq, dim)
    """
    tq = x_ref.shape[0]
    two_max_len = table_ref.shape[0]

    ix = idx_ref[:, 0:1]                                    # (tq, 1)
    iy = idx_ref[:, 1:2]                                    # (tq, 1)

    # Single one-hot with (at most) two ones per row; the block-diagonal table
    # makes one dot produce [Tx[ix] | Ty[iy]] already concatenated along lanes.
    iota = jax.lax.broadcasted_iota(jnp.int32, (tq, two_max_len), 1)
    oh = ((iota == ix) | (iota == iy)).astype(jnp.float32)  # (tq, 2*max_len)

    pe = jnp.dot(oh, table_ref[...], preferred_element_type=jnp.float32)

    # Add in f32 (safe on v5e which has no bf16 VPU), cast to output dtype.
    o_ref[...] = (x_ref[...].astype(jnp.float32) + pe).astype(o_ref.dtype)


def positional_embedding_2d(x, coords, table_x, table_y, *, tile_size, tq=256):
    """x: (seq_len, dim); coords: (seq_len, 3) int; tables: (max_len, dim//2)."""
    seq_len, dim = x.shape
    max_len, half = table_x.shape
    assert half * 2 == dim, "dim must be 2 * table width"

    # ---- hoisted preprocessing (cheap, O(seq_len)) ----------------------
    cx = coords[:, 1].astype(jnp.int32)
    cy = coords[:, 2].astype(jnp.int32)
    dx = cx - jnp.min(cx)                       # >= 0, so // == floor-div
    dy = cy - jnp.min(cy)
    if tile_size & (tile_size - 1) == 0:        # power of two -> shift
        shift = tile_size.bit_length() - 1
        ix = jnp.right_shift(dx, shift)
        iy = jnp.right_shift(dy, shift)
    else:
        ix = dx // tile_size
        iy = dy // tile_size
    ix = jnp.clip(ix, 0, max_len - 1)
    iy = jnp.clip(iy, 0, max_len - 1) + max_len          # offset into fused table
    idx = jnp.stack([ix, iy], axis=1).astype(jnp.int32)  # (seq_len, 2)

    # Fused block-diagonal table (in production precompute this once).
    fused = jnp.zeros((2 * max_len, dim), dtype=jnp.float32)
    fused = fused.at[:max_len, :half].set(table_x.astype(jnp.float32))
    fused = fused.at[max_len:, half:].set(table_y.astype(jnp.float32))

    # ---- tiling: large tq, pad seq_len to a multiple of tq --------------
    tq = max(8, min(int(tq), _round_up(seq_len, 8)))
    tq = _round_up(tq, 8)
    seq_pad = _round_up(seq_len, tq)
    if seq_pad != seq_len:
        pad = seq_pad - seq_len
        x_in = jnp.pad(x, ((0, pad), (0, 0)))
        idx_in = jnp.pad(idx, ((0, pad), (0, 0)))   # padded idx=0 is in range
    else:
        x_in, idx_in = x, idx

    grid = (seq_pad // tq,)

    out = pl.pallas_call(
        _pe2d_kernel,
        out_shape=jax.ShapeDtypeStruct((seq_pad, dim), x.dtype),
        grid_spec=pltpu.PrefetchScalarGridSpec(
            num_scalar_prefetch=0,
            grid=grid,
            in_specs=[
                pl.BlockSpec((tq, 2), lambda i: (i, 0)),              # indices
                pl.BlockSpec((tq, dim), lambda i: (i, 0)),            # x tile
                pl.BlockSpec((2 * max_len, dim), lambda i: (0, 0)),   # fused table
            ],
            out_specs=pl.BlockSpec((tq, dim), lambda i: (i, 0)),
        ),
        compiler_params=pltpu.CompilerParams(
            dimension_semantics=("parallel",),
            vmem_limit_bytes=32 * 1024 * 1024,
        ),
    )(idx_in, x_in, fused)

    return out[:seq_len] if seq_pad != seq_len else out


def _reference(x, coords, table_x, table_y, tile_size):
    cx = coords[:, 1]
    cy = coords[:, 2]
    ix = (cx - cx.min()) // tile_size
    iy = (cy - cy.min()) // tile_size
    pe = jnp.concatenate([table_x[ix], table_y[iy]], axis=1)
    return x + pe


if __name__ == "__main__":
    key = jax.random.PRNGKey(0)

    # --- test 1: lane-dense dim, grid of 2 (both v7x TensorCores busy) ----
    tile_size = 4          # power of two -> shift path
    dim = 128
    max_len = 512
    seq_len = 512

    k_x, k_tx, k_ty, k_c = jax.random.split(key, 4)
    table_x = jax.random.normal(k_tx, (max_len, dim // 2), dtype=jnp.float32)
    table_y = jax.random.normal(k_ty, (max_len, dim // 2), dtype=jnp.float32)
    x = jax.random.normal(k_x, (seq_len, dim), dtype=jnp.float32)
    coords = jax.random.randint(k_c, (seq_len, 3), 0, 1000, dtype=jnp.int32)

    out = jax.block_until_ready(
        positional_embedding_2d(x, coords, table_x, table_y,
                                tile_size=tile_size, tq=256))
    ref = _reference(x, coords, table_x, table_y, tile_size)
    assert jnp.allclose(out, ref, atol=1e-5, rtol=1e-5), "mismatch (test 1)"

    # --- test 2: small ragged seq_len, narrow dim, non-pow2 tile_size -----
    tile_size2 = 5
    dim2 = 32
    max_len2 = 64
    seq_len2 = 40

    k_x2, k_tx2, k_ty2, k_c2 = jax.random.split(jax.random.PRNGKey(1), 4)
    table_x2 = jax.random.normal(k_tx2, (max_len2, dim2 // 2), dtype=jnp.float32)
    table_y2 = jax.random.normal(k_ty2, (max_len2, dim2 // 2), dtype=jnp.float32)
    x2 = jax.random.normal(k_x2, (seq_len2, dim2), dtype=jnp.float32)
    coords2 = jax.random.randint(k_c2, (seq_len2, 3), 0, 300, dtype=jnp.int32)

    out2 = jax.block_until_ready(
        positional_embedding_2d(x2, coords2, table_x2, table_y2,
                                tile_size=tile_size2, tq=256))
    ref2 = _reference(x2, coords2, table_x2, table_y2, tile_size2)
    assert jnp.allclose(out2, ref2, atol=1e-5, rtol=1e-5), "mismatch (test 2)"

    print("KERNEL_OK")
</pallas_src>

<mosaic_0001>
module attributes {stable_mosaic.version = 11 : i64} {
  func.func @_pe2d_kernel(%arg0: i32, %arg1: memref<256x2xi32, #tpu.memory_space<vmem>>, %arg2: memref<256x128xf32, #tpu.memory_space<vmem>>, %arg3: memref<1024x128xf32, #tpu.memory_space<vmem>>, %arg4: memref<256x128xf32, #tpu.memory_space<vmem>>) attributes {dimension_semantics = [#tpu.dimension_semantics<parallel>], iteration_bounds = array<i64: 2>, scalar_prefetch = 0 : i64, scratch_operands = 0 : i64, tpu.core_type = #tpu.core_type<tc>, window_params = [{transform_indices = @transform_0, window_bounds = array<i64: 256, 2>}, {transform_indices = @transform_1, window_bounds = array<i64: 256, 128>}, {pipeline_mode = #tpu.pipeline_mode<synchronous>, transform_indices = @transform_2, window_bounds = array<i64: 1024, 128>}, {transform_indices = @transform_3, window_bounds = array<i64: 256, 128>}]} {
    %c0 = arith.constant 0 : index
    %c0_0 = arith.constant 0 : index
    %0 = vector.load %arg1[%c0, %c0_0] : memref<256x2xi32, #tpu.memory_space<vmem>>, vector<256x1xi32>
    %c0_1 = arith.constant 0 : index
    %c1 = arith.constant 1 : index
    %1 = vector.load %arg1[%c0_1, %c1] : memref<256x2xi32, #tpu.memory_space<vmem>>, vector<256x1xi32>
    %2 = tpu.iota {dimensions = array<i32: 1>} : vector<256x1024xi32>
    %3 = vector.broadcast %0 : vector<256x1xi32> to vector<256x1024xi32>
    %4 = arith.cmpi eq, %2, %3 : vector<256x1024xi32>
    %5 = vector.broadcast %1 : vector<256x1xi32> to vector<256x1024xi32>
    %6 = arith.cmpi eq, %2, %5 : vector<256x1024xi32>
    %7 = arith.ori %4, %6 : vector<256x1024xi1>
    %8 = arith.extui %7 : vector<256x1024xi1> to vector<256x1024xi32>
    %9 = arith.sitofp %8 : vector<256x1024xi32> to vector<256x1024xf32>
    %c0_2 = arith.constant 0 : index
    %c0_3 = arith.constant 0 : index
    %10 = vector.load %arg3[%c0_2, %c0_3] : memref<1024x128xf32, #tpu.memory_space<vmem>>, vector<1024x128xf32>
    %cst = arith.constant dense<0.000000e+00> : vector<256x128xf32>
    %11 = tpu.matmul %9, %10, %cst {dimension_numbers = #tpu.dot_dimension_numbers<[1], [0], [0], [1], [0, 0, 1, 1], [], []>} : vector<256x1024xf32>, vector<1024x128xf32>, vector<256x128xf32> -> vector<256x128xf32>
    %c0_4 = arith.constant 0 : index
    %c0_5 = arith.constant 0 : index
    %12 = vector.load %arg2[%c0_4, %c0_5] : memref<256x128xf32, #tpu.memory_space<vmem>>, vector<256x128xf32>
    %13 = arith.addf %12, %11 : vector<256x128xf32>
    %c0_6 = arith.constant 0 : index
    %c0_7 = arith.constant 0 : index
    %14 = vector.load %arg4[%c0_6, %c0_7] : memref<256x128xf32, #tpu.memory_space<vmem>>, vector<256x128xf32>
    tpu.vector_store %arg4[%c0_6, %c0_7], %13 {strides = array<i32>} : memref<256x128xf32, #tpu.memory_space<vmem>>, vector<256x128xf32>,
    return
  }
  func.func @transform_0(%arg0: i32) -> (i32, i32) {
    %c0_i32 = arith.constant 0 : i32
    %c0_i32_0 = arith.constant 0 : i32
    return %arg0, %c0_i32 : i32, i32
  }
  func.func @transform_1(%arg0: i32) -> (i32, i32) {
    %c0_i32 = arith.constant 0 : i32
    %c0_i32_0 = arith.constant 0 : i32
    return %arg0, %c0_i32 : i32, i32
  }
  func.func @transform_2(%arg0: i32) -> (i32, i32) {
    %c0_i32 = arith.constant 0 : i32
    %c0_i32_0 = arith.constant 0 : i32
    %c0_i32_1 = arith.constant 0 : i32
    return %c0_i32, %c0_i32_0 : i32, i32
  }
  func.func @transform_3(%arg0: i32) -> (i32, i32) {
    %c0_i32 = arith.constant 0 : i32
    %c0_i32_0 = arith.constant 0 : i32
    return %arg0, %c0_i32 : i32, i32
  }
}

</mosaic_0001>

<llo_original>
// kernel: tpu_custom_call.1
$region0: #{tpu_custom_call.1}
  #allocation0 [shape = 'u32[]', space=smem, size = 0x4, offset = 0x4, fixed_abs, tag = 'smem constant byte address 0x4 - core index']
  #allocation1 [shape = 'u32[72,128]{1,0:T(1,128)}', space=vmem, size = 0x9000, scoped, tag = 'internal scratch']
  %s0 = inlined_call_operand.vmem [shape: s32[512,2], index: 0, kind: input, shape index: {}]
  %s1 = inlined_call_operand.vmem [shape: f32[512,128], index: 1, kind: input, shape index: {}]
  %s2 = inlined_call_operand.hbm [shape: f32[1024,128], index: 2, kind: input, shape index: {}]
  %s3 = inlined_call_operand.hbm [shape: f32[512,128], index: 3, kind: output, shape index: {}]
  %s4 = sld [smem:[#allocation0]]
  $region49: #{tpu_custom_call.1} parent=0
    _
  %s6 = ssub.s32 1, %s4
  %s7 = scalar_select 0, %s6, %s4
  $region1: #{tpu_custom_call.1} parent=0
    #allocation2 [shape = 'u8[524288]{0}', space=vmem, size = 0x80000, scoped, tag = 'input window, operand 2, single buffered']
    #allocation3 [shape = 's32[2]{0}', space=sflag, size = 0x8, scoped, tag = 'scoped memory for tpu_custom_call.1']
    #allocation4 [shape = 's32[2]{0}', space=sflag, size = 0x8, scoped, tag = 'scoped memory for tpu_custom_call.1']
    #allocation5 [shape = 'u8[262144]{0}', space=vmem, size = 0x40000, scoped, tag = 'output window, operand 0']
    %8 = vsyncpa [#allocation3], 0
    %9 = vsyncpa [#allocation4], 0
    %s10 = scalar_lea.sflag [#allocation4], 1
    %11 = vsyncpa %s10, 0
    loop: start=0, step=1, limit=4
    $region2: #{tpu_custom_call.1} parent=1 // loop_pre_header
      _
    $region3: #{tpu_custom_call.1} parent=1 // loop_header
      %s13 = sphi 0, %s17
      %p14 = scmp.ge.s32.totalorder %s13, 4
      %s23 = sphi 0, %s25
      %s26 = sphi 0, %s23
      %s27 = sphi 0, %s26
      %s43 = sphi 0, %s27
      %s49 = sphi 0, %s51
      %s52 = sphi 0, %s49
      %s53 = sphi 0, %s52
      %s69 = sphi 0, %s53
      %s73 = sphi 0, %s73
      %s75 = sphi 0, %s73
      %s76 = sphi 0, %s75
      %s90 = sphi 0, %s76
      %s96 = sphi 0, %s98
      %s99 = sphi 0, %s96
      %s100 = sphi 0, %s99
      %s116 = sphi 0, %s100
    $region4: #{tpu_custom_call.1} parent=1 // loop_header_branch
      %16 = sbr.rel (%p14) target = $region8
    $region5: #{tpu_custom_call.1} parent=1 // loop_body
      %s18 = ssub.s32 %s13, 1
      %s19 = ssub.s32 %s13, 2
      %s20 = sadd.s32 %s13, 1
      %s21 = ssub.s32 %s13, %s20
      %p22 = scmp.eq.s32.totalorder %s21, 0
      %s24 = sadd.s32 %s23, 1
      %s25 = scalar_select %p22, %s23, %s24
      %p28 = pneg %p22
      %p29 = scmp.eq.s32.totalorder %s13, 1
      %p30 = por %p28, %p29
      %p31 = scmp.ne.s32.totalorder %s23, %s26
      %p32 = scmp.eq.s32.totalorder %s13, 0
      %p33 = por %p31, %p32
      %p34 = scmp.ne.s32.totalorder %s23, %s26
      %p35 = scmp.eq.s32.totalorder %s18, 1
      %p36 = por %p34, %p35
      %p37 = scmp.ne.s32.totalorder %s26, %s27
      %p38 = scmp.eq.s32.totalorder %s18, 0
      %p39 = por %p37, %p38
      %p40 = scmp.ne.s32.totalorder %s26, %s27
      %p41 = scmp.eq.s32.totalorder %s19, 1
      %p42 = por %p40, %p41
      %p44 = scmp.ne.s32.totalorder %s27, %s43
      %p45 = scmp.eq.s32.totalorder %s19, 0
      %p46 = por %p44, %p45
      %s47 = ssub.s32 %s13, %s20
      %p48 = scmp.eq.s32.totalorder %s47, 0
      %s50 = sadd.s32 %s49, 1
      %s51 = scalar_select %p48, %s49, %s50
      %p54 = pneg %p48
      %p55 = scmp.eq.s32.totalorder %s13, 1
      %p56 = por %p54, %p55
      %p57 = scmp.ne.s32.totalorder %s49, %s52
      %p58 = scmp.eq.s32.totalorder %s13, 0
      %p59 = por %p57, %p58
      %p60 = scmp.ne.s32.totalorder %s49, %s52
      %p61 = scmp.eq.s32.totalorder %s18, 1
      %p62 = por %p60, %p61
      %p63 = scmp.ne.s32.totalorder %s52, %s53
      %p64 = scmp.eq.s32.totalorder %s18, 0
      %p65 = por %p63, %p64
      %p66 = scmp.ne.s32.totalorder %s52, %s53
      %p67 = scmp.eq.s32.totalorder %s19, 1
      %p68 = por %p66, %p67
      %p70 = scmp.ne.s32.totalorder %s53, %s69
      %p71 = scmp.eq.s32.totalorder %s19, 0
      %p72 = por %p70, %p71
      %s74 = sadd.s32 %s73, 1
      %p77 = scmp.eq.s32.totalorder %s13, 1
      %p78 = scmp.ne.s32.totalorder %s73, %s75
      %p79 = scmp.eq.s32.totalorder %s13, 0
      %p80 = por %p78, %p79
      %p81 = scmp.ne.s32.totalorder %s73, %s75
      %p82 = scmp.eq.s32.totalorder %s18, 1
      %p83 = por %p81, %p82
      %p84 = scmp.ne.s32.totalorder %s75, %s76
      %p85 = scmp.eq.s32.totalorder %s18, 0
      %p86 = por %p84, %p85
      %p87 = scmp.ne.s32.totalorder %s75, %s76
      %p88 = scmp.eq.s32.totalorder %s19, 1
      %p89 = por %p87, %p88
      %p91 = scmp.ne.s32.totalorder %s76, %s90
      %p92 = scmp.eq.s32.totalorder %s19, 0
      %p93 = por %p91, %p92
      %s94 = ssub.s32 %s13, %s20
      %p95 = scmp.eq.s32.totalorder %s94, 0
      %s97 = sadd.s32 %s96, 1
      %s98 = scalar_select %p95, %s96, %s97
      %p101 = pneg %p95
      %p102 = scmp.eq.s32.totalorder %s13, 1
      %p103 = por %p101, %p102
      %p104 = scmp.ne.s32.totalorder %s96, %s99
      %p105 = scmp.eq.s32.totalorder %s13, 0
      %p106 = por %p104, %p105
      %p107 = scmp.ne.s32.totalorder %s96, %s99
      %p108 = scmp.eq.s32.totalorder %s18, 1
      %p109 = por %p107, %p108
      %p110 = scmp.ne.s32.totalorder %s99, %s100
      %p111 = scmp.eq.s32.totalorder %s18, 0
      %p112 = por %p110, %p111
      %p113 = scmp.ne.s32.totalorder %s99, %s100
      %p114 = scmp.eq.s32.totalorder %s19, 1
      %p115 = por %p113, %p114
      %p117 = scmp.ne.s32.totalorder %s100, %s116
      %p118 = scmp.eq.s32.totalorder %s19, 0
      %p119 = por %p117, %p118
      %p120 = scmp.le.s32.totalorder 1, %s13
      %p121 = scmp.lt.s32.totalorder %s13, 3
      %p122 = pnand %p120, %p121
      %p123 = pneg %p122
      // Predicated region
      $region9: #{tpu_custom_call.1} parent=5 // pred_check
        _
      $region10: #{tpu_custom_call.1} parent=5 // pred_check_branch
        %125 = sbr.rel (%p122) target = $region12
      $region11: #{tpu_custom_call.1} parent=5 // pred_region
        %s126 = ssub.s32 %s13, 1
        // Predicated region
        $region13: #{tpu_custom_call.1} parent=11 // pred_check
          %p127 = pneg %p86
        $region14: #{tpu_custom_call.1} parent=11 // pred_check_branch
          %129 = sbr.rel (%p127) target = $region16
        $region15: #{tpu_custom_call.1} parent=11 // pred_region
          %131 = vsyncadd [#allocation3], 0
          %s132 = sshll.u32 %s2, 4
          %s133 = int_to_ptr.hbm [resolvable:$true] %s132
          %s134 = sshll.u32 [#allocation2], 4
          %s135 = int_to_ptr.vmem [resolvable:$true] %s134
          %140 = dma.hbm_to_vmem [thread:$0]  %s133, 16384, %s135, [#allocation3], 128, 128, 8
        $region16: #{tpu_custom_call.1} parent=11 // pred_fallthru
          _
      $region12: #{tpu_custom_call.1} parent=5 // pred_fallthru
        _
      %p141 = scmp.lt.s32.totalorder %s13, 2
      // Predicated region
      $region17: #{tpu_custom_call.1} parent=5 // pred_check
        %p142 = pneg %p141
      $region18: #{tpu_custom_call.1} parent=5 // pred_check_branch
        %144 = sbr.rel (%p142) target = $region20
      $region19: #{tpu_custom_call.1} parent=5 // pred_region
        // Predicated region
        $region21: #{tpu_custom_call.1} parent=19 // pred_check
          %p145 = pneg %p33
        $region22: #{tpu_custom_call.1} parent=19 // pred_check_branch
          %147 = sbr.rel (%p145) target = $region24
        $region23: #{tpu_custom_call.1} parent=19 // pred_region
          %s148 = smul.u32 32, %s13
          %p149 = scmp.lt.s32.totalorder %s148, 63
          %s150 = scalar_select %p149, %s148, 63
          %s151 = smul.addr %s150, 8
          %s152 = scalar_lea.vmem %s0, %s151
          %s153 = smul.u32 32, %s13
        $region24: #{tpu_custom_call.1} parent=19 // pred_fallthru
          _
        // Predicated region
        $region25: #{tpu_custom_call.1} parent=19 // pred_check
          %p154 = pneg %p59
        $region26: #{tpu_custom_call.1} parent=19 // pred_check_branch
          %156 = sbr.rel (%p154) target = $region28
        $region27: #{tpu_custom_call.1} parent=19 // pred_region
          %s157 = smul.u32 32, %s13
          %p158 = scmp.lt.s32.totalorder %s157, 63
          %s159 = scalar_select %p158, %s157, 63
          %s160 = smul.addr %s159, 8
          %s161 = scalar_lea.vmem %s1, %s160
          %s162 = smul.u32 32, %s13
        $region28: #{tpu_custom_call.1} parent=19 // pred_fallthru
          _
      $region20: #{tpu_custom_call.1} parent=5 // pred_fallthru
        _
      %p163 = scmp.le.s32.totalorder 1, %s13
      %p164 = scmp.lt.s32.totalorder %s13, 3
      %p165 = pnand %p163, %p164
      %p166 = pneg %p165
      // Predicated region
      $region29: #{tpu_custom_call.1} parent=5 // pred_check
        _
      $region30: #{tpu_custom_call.1} parent=5 // pred_check_branch
        %168 = sbr.rel (%p165) target = $region32
      $region31: #{tpu_custom_call.1} parent=5 // pred_region
        %s169 = ssub.s32 %s13, 1
        // Predicated region
        $region33: #{tpu_custom_call.1} parent=31 // pred_check
          %p170 = pneg %p86
        $region34: #{tpu_custom_call.1} parent=31 // pred_check_branch
          %172 = sbr.rel (%p170) target = $region36
        $region35: #{tpu_custom_call.1} parent=31 // pred_region
          %174 = dma.done [#allocation3], 16384
        $region36: #{tpu_custom_call.1} parent=31 // pred_fallthru
          _
        %s175 = smul.u32 32, %s18
        %p176 = scmp.lt.s32.totalorder %s175, 63
        %s177 = scalar_select %p176, %s175, 63
        %s178 = smul.addr %s177, 8
        %s179 = scalar_lea.vmem %s0, %s178
        %p180 = pneg %p39
        %p181 = pneg %p36
        %s182 = smul.u32 32, %s18
        %p183 = scmp.lt.s32.totalorder %s182, 63
        %s184 = scalar_select %p183, %s182, 63
        %s185 = smul.addr %s184, 8
        %s186 = scalar_lea.vmem %s1, %s185
        %p187 = pneg %p65
        %p188 = pneg %p62
        %p189 = pneg %p86
        %p190 = pneg %p83
        %p191 = pneg %p112
        %p192 = pneg %p109
        %s193 = sand.u32 %s99, 1
        %s194 = scalar_lea.sflag [#allocation4], %s193
        %s195 = sand.u32 %s99, 1
        %s196 = smul.addr %s195, 256
        %s197 = scalar_lea.vmem [#allocation5], %s196
        %s198 = smul.u32 32, %s18
        %p199 = scmp.lt.s32.totalorder %s198, 63
        %s200 = scalar_select %p199, %s198, 63
        %s201 = smul.addr %s200, 8
        %s202 = scalar_lea.vmem %s0, %s201
        %s203 = smul.u32 32, %s18
        %s204 = smul.u32 32, %s18
        %p205 = scmp.lt.s32.totalorder %s204, 63
        %s206 = scalar_select %p205, %s204, 63
        %s207 = smul.addr %s206, 8
        %s208 = scalar_lea.vmem %s1, %s207
        %s209 = smul.u32 32, %s18
        %s210 = smul.u32 32, %s18
        %v211 = vld [vmem:[%s202] sm:$0xff]
        %v212 = vld [vmem:[%s202 + $0x8] sm:$0xff]
        %v213 = vld [vmem:[%s202 + $0x10] sm:$0xff]
        %v214 = vld [vmem:[%s202 + $0x18] sm:$0xff]
        %v215 = vld [vmem:[%s202 + $0x20] sm:$0xff]
        %v216 = vld [vmem:[%s202 + $0x28] sm:$0xff]
        %v217 = vld [vmem:[%s202 + $0x30] sm:$0xff]
        %v218 = vld [vmem:[%s202 + $0x38] sm:$0xff]
        %v219 = vld [vmem:[%s202 + $0x40] sm:$0xff]
        %v220 = vld [vmem:[%s202 + $0x48] sm:$0xff]
        %v221 = vld [vmem:[%s202 + $0x50] sm:$0xff]
        %v222 = vld [vmem:[%s202 + $0x58] sm:$0xff]
        %v223 = vld [vmem:[%s202 + $0x60] sm:$0xff]
        %v224 = vld [vmem:[%s202 + $0x68] sm:$0xff]
        %v225 = vld [vmem:[%s202 + $0x70] sm:$0xff]
        %v226 = vld [vmem:[%s202 + $0x78] sm:$0xff]
        %v227 = vld [vmem:[%s202 + $0x80] sm:$0xff]
        %v228 = vld [vmem:[%s202 + $0x88] sm:$0xff]
        %v229 = vld [vmem:[%s202 + $0x90] sm:$0xff]
        %v230 = vld [vmem:[%s202 + $0x98] sm:$0xff]
        %v231 = vld [vmem:[%s202 + $0xa0] sm:$0xff]
        %v232 = vld [vmem:[%s202 + $0xa8] sm:$0xff]
        %v233 = vld [vmem:[%s202 + $0xb0] sm:$0xff]
        %v234 = vld [vmem:[%s202 + $0xb8] sm:$0xff]
        %v235 = vld [vmem:[%s202 + $0xc0] sm:$0xff]
        %v236 = vld [vmem:[%s202 + $0xc8] sm:$0xff]
        %v237 = vld [vmem:[%s202 + $0xd0] sm:$0xff]
        %v238 = vld [vmem:[%s202 + $0xd8] sm:$0xff]
        %v239 = vld [vmem:[%s202 + $0xe0] sm:$0xff]
        %v240 = vld [vmem:[%s202 + $0xe8] sm:$0xff]
        %v241 = vld [vmem:[%s202 + $0xf0] sm:$0xff]
        %v242 = vld [vmem:[%s202 + $0xf8] sm:$0xff]
        %v243 = vlaneseq
        %v244 = vand.u32 %v243, 127
        %v245 = vadd.s32 %v244, 128
        %v246 = vadd.s32 %v244, 256
        %v247 = vadd.s32 %v244, 384
        %v248 = vadd.s32 %v244, 512
        %v249 = vadd.s32 %v244, 640
        %v250 = vadd.s32 %v244, 768
        %v251 = vadd.s32 %v244, 896
        %252 = vset.pattern.permute.xlu0 0
        %253 = vperm.xlu0 %252, %v211
        %v254 = vpop.permute.xlu0 %253
        %255 = vset.pattern.permute.xlu0 0
        %256 = vperm.xlu0 %255, %v212
        %v257 = vpop.permute.xlu0 %256
        %258 = vset.pattern.permute.xlu0 0
        %259 = vperm.xlu0 %258, %v213
        %v260 = vpop.permute.xlu0 %259
        %261 = vset.pattern.permute.xlu0 0
        %262 = vperm.xlu0 %261, %v214
        %v263 = vpop.permute.xlu0 %262
        %264 = vset.pattern.permute.xlu0 0
        %265 = vperm.xlu0 %264, %v215
        %v266 = vpop.permute.xlu0 %265
        %267 = vset.pattern.permute.xlu0 0
        %268 = vperm.xlu0 %267, %v216
        %v269 = vpop.permute.xlu0 %268
        %270 = vset.pattern.permute.xlu0 0
        %271 = vperm.xlu0 %270, %v217
        %v272 = vpop.permute.xlu0 %271
        %273 = vset.pattern.permute.xlu0 0
        %274 = vperm.xlu0 %273, %v218
        %v275 = vpop.permute.xlu0 %274
        %276 = vset.pattern.permute.xlu0 0
        %277 = vperm.xlu0 %276, %v219
        %v278 = vpop.permute.xlu0 %277
        %279 = vset.pattern.permute.xlu0 0
        %280 = vperm.xlu0 %279, %v220
        %v281 = vpop.permute.xlu0 %280
        %282 = vset.pattern.permute.xlu0 0
        %283 = vperm.xlu0 %282, %v221
        %v284 = vpop.permute.xlu0 %283
        %285 = vset.pattern.permute.xlu0 0
        %286 = vperm.xlu0 %285, %v222
        %v287 = vpop.permute.xlu0 %286
        %288 = vset.pattern.permute.xlu0 0
        %289 = vperm.xlu0 %288, %v223
        %v290 = vpop.permute.xlu0 %289
        %291 = vset.pattern.permute.xlu0 0
        %292 = vperm.xlu0 %291, %v224
        %v293 = vpop.permute.xlu0 %292
        %294 = vset.pattern.permute.xlu0 0
        %295 = vperm.xlu0 %294, %v225
        %v296 = vpop.permute.xlu0 %295
        %297 = vset.pattern.permute.xlu0 0
        %298 = vperm.xlu0 %297, %v226
        %v299 = vpop.permute.xlu0 %298
        %300 = vset.pattern.permute.xlu0 0
        %301 = vperm.xlu0 %300, %v227
        %v302 = vpop.permute.xlu0 %301
        %303 = vset.pattern.permute.xlu0 0
        %304 = vperm.xlu0 %303, %v228
        %v305 = vpop.permute.xlu0 %304
        %306 = vset.pattern.permute.xlu0 0
        %307 = vperm.xlu0 %306, %v229
        %v308 = vpop.permute.xlu0 %307
        %309 = vset.pattern.permute.xlu0 0
        %310 = vperm.xlu0 %309, %v230
        %v311 = vpop.permute.xlu0 %310
        %312 = vset.pattern.permute.xlu0 0
        %313 = vperm.xlu0 %312, %v231
        %v314 = vpop.permute.xlu0 %313
        %315 = vset.pattern.permute.xlu0 0
        %316 = vperm.xlu0 %315, %v232
        %v317 = vpop.permute.xlu0 %316
        %318 = vset.pattern.permute.xlu0 0
        %319 = vperm.xlu0 %318, %v233
        %v320 = vpop.permute.xlu0 %319
        %321 = vset.pattern.permute.xlu0 0
        %322 = vperm.xlu0 %321, %v234
        %v323 = vpop.permute.xlu0 %322
        %324 = vset.pattern.permute.xlu0 0
        %325 = vperm.xlu0 %324, %v235
        %v326 = vpop.permute.xlu0 %325
        %327 = vset.pattern.permute.xlu0 0
        %328 = vperm.xlu0 %327, %v236
        %v329 = vpop.permute.xlu0 %328
        %330 = vset.pattern.permute.xlu0 0
        %331 = vperm.xlu0 %330, %v237
        %v332 = vpop.permute.xlu0 %331
        %333 = vset.pattern.permute.xlu0 0
        %334 = vperm.xlu0 %333, %v238
        %v335 = vpop.permute.xlu0 %334
        %336 = vset.pattern.permute.xlu0 0
        %337 = vperm.xlu0 %336, %v239
        %v338 = vpop.permute.xlu0 %337
        %339 = vset.pattern.permute.xlu0 0
        %340 = vperm.xlu0 %339, %v240
        %v341 = vpop.permute.xlu0 %340
        %342 = vset.pattern.permute.xlu0 0
        %343 = vperm.xlu0 %342, %v241
        %v344 = vpop.permute.xlu0 %343
        %345 = vset.pattern.permute.xlu0 0
        %346 = vperm.xlu0 %345, %v242
        %v347 = vpop.permute.xlu0 %346
        %vm348 = vcmp.eq.s32.totalorder %v244, %v254
        %vm349 = vcmp.eq.s32.totalorder %v245, %v254
        %vm350 = vcmp.eq.s32.totalorder %v246, %v254
        %vm351 = vcmp.eq.s32.totalorder %v247, %v254
        %vm352 = vcmp.eq.s32.totalorder %v248, %v254
        %vm353 = vcmp.eq.s32.totalorder %v249, %v254
        %vm354 = vcmp.eq.s32.totalorder %v250, %v254
        %vm355 = vcmp.eq.s32.totalorder %v251, %v254
        %vm356 = vcmp.eq.s32.totalorder %v244, %v257
        %vm357 = vcmp.eq.s32.totalorder %v245, %v257
        %vm358 = vcmp.eq.s32.totalorder %v246, %v257
        %vm359 = vcmp.eq.s32.totalorder %v247, %v257
        %vm360 = vcmp.eq.s32.totalorder %v248, %v257
        %vm361 = vcmp.eq.s32.totalorder %v249, %v257
        %vm362 = vcmp.eq.s32.totalorder %v250, %v257
        %vm363 = vcmp.eq.s32.totalorder %v251, %v257
        %vm364 = vcmp.eq.s32.totalorder %v244, %v260
        %vm365 = vcmp.eq.s32.totalorder %v245, %v260
        %vm366 = vcmp.eq.s32.totalorder %v246, %v260
        %vm367 = vcmp.eq.s32.totalorder %v247, %v260
        %vm368 = vcmp.eq.s32.totalorder %v248, %v260
        %vm369 = vcmp.eq.s32.totalorder %v249, %v260
        %vm370 = vcmp.eq.s32.totalorder %v250, %v260
        %vm371 = vcmp.eq.s32.totalorder %v251, %v260
        %vm372 = vcmp.eq.s32.totalorder %v244, %v263
        %vm373 = vcmp.eq.s32.totalorder %v245, %v263
        %vm374 = vcmp.eq.s32.totalorder %v246, %v263
        %vm375 = vcmp.eq.s32.totalorder %v247, %v263
        %vm376 = vcmp.eq.s32.totalorder %v248, %v263
        %vm377 = vcmp.eq.s32.totalorder %v249, %v263
        %vm378 = vcmp.eq.s32.totalorder %v250, %v263
        %vm379 = vcmp.eq.s32.totalorder %v251, %v263
        %vm380 = vcmp.eq.s32.totalorder %v244, %v266
        %vm381 = vcmp.eq.s32.totalorder %v245, %v266
        %vm382 = vcmp.eq.s32.totalorder %v246, %v266
        %vm383 = vcmp.eq.s32.totalorder %v247, %v266
        %vm384 = vcmp.eq.s32.totalorder %v248, %v266
        %vm385 = vcmp.eq.s32.totalorder %v249, %v266
        %vm386 = vcmp.eq.s32.totalorder %v250, %v266
        %vm387 = vcmp.eq.s32.totalorder %v251, %v266
        %vm388 = vcmp.eq.s32.totalorder %v244, %v269
        %vm389 = vcmp.eq.s32.totalorder %v245, %v269
        %vm390 = vcmp.eq.s32.totalorder %v246, %v269
        %vm391 = vcmp.eq.s32.totalorder %v247, %v269
        %vm392 = vcmp.eq.s32.totalorder %v248, %v269
        %vm393 = vcmp.eq.s32.totalorder %v249, %v269
        %vm394 = vcmp.eq.s32.totalorder %v250, %v269
        %vm395 = vcmp.eq.s32.totalorder %v251, %v269
        %vm396 = vcmp.eq.s32.totalorder %v244, %v272
        %vm397 = vcmp.eq.s32.totalorder %v245, %v272
        %vm398 = vcmp.eq.s32.totalorder %v246, %v272
        %vm399 = vcmp.eq.s32.totalorder %v247, %v272
        %vm400 = vcmp.eq.s32.totalorder %v248, %v272
        %vm401 = vcmp.eq.s32.totalorder %v249, %v272
        %vm402 = vcmp.eq.s32.totalorder %v250, %v272
        %vm403 = vcmp.eq.s32.totalorder %v251, %v272
        %vm404 = vcmp.eq.s32.totalorder %v244, %v275
        %vm405 = vcmp.eq.s32.totalorder %v245, %v275
        %vm406 = vcmp.eq.s32.totalorder %v246, %v275
        %vm407 = vcmp.eq.s32.totalorder %v247, %v275
        %vm408 = vcmp.eq.s32.totalorder %v248, %v275
        %vm409 = vcmp.eq.s32.totalorder %v249, %v275
        %vm410 = vcmp.eq.s32.totalorder %v250, %v275
        %vm411 = vcmp.eq.s32.totalorder %v251, %v275
        %vm412 = vcmp.eq.s32.totalorder %v244, %v278
        %vm413 = vcmp.eq.s32.totalorder %v245, %v278
        %vm414 = vcmp.eq.s32.totalorder %v246, %v278
        %vm415 = vcmp.eq.s32.totalorder %v247, %v278
        %vm416 = vcmp.eq.s32.totalorder %v248, %v278
        %vm417 = vcmp.eq.s32.totalorder %v249, %v278
        %vm418 = vcmp.eq.s32.totalorder %v250, %v278
        %vm419 = vcmp.eq.s32.totalorder %v251, %v278
        %vm420 = vcmp.eq.s32.totalorder %v244, %v281
        %vm421 = vcmp.eq.s32.totalorder %v245, %v281
        %vm422 = vcmp.eq.s32.totalorder %v246, %v281
        %vm423 = vcmp.eq.s32.totalorder %v247, %v281
        %vm424 = vcmp.eq.s32.totalorder %v248, %v281
        %vm425 = vcmp.eq.s32.totalorder %v249, %v281
        %vm426 = vcmp.eq.s32.totalorder %v250, %v281
        %vm427 = vcmp.eq.s32.totalorder %v251, %v281
        %vm428 = vcmp.eq.s32.totalorder %v244, %v284
        %vm429 = vcmp.eq.s32.totalorder %v245, %v284
        %vm430 = vcmp.eq.s32.totalorder %v246, %v284
        %vm431 = vcmp.eq.s32.totalorder %v247, %v284
        %vm432 = vcmp.eq.s32.totalorder %v248, %v284
        %vm433 = vcmp.eq.s32.totalorder %v249, %v284
        %vm434 = vcmp.eq.s32.totalorder %v250, %v284
        %vm435 = vcmp.eq.s32.totalorder %v251, %v284
        %vm436 = vcmp.eq.s32.totalorder %v244, %v287
        %vm437 = vcmp.eq.s32.totalorder %v245, %v287
        %vm438 = vcmp.eq.s32.totalorder %v246, %v287
        %vm439 = vcmp.eq.s32.totalorder %v247, %v287
        %vm440 = vcmp.eq.s32.totalorder %v248, %v287
        %vm441 = vcmp.eq.s32.totalorder %v249, %v287
        %vm442 = vcmp.eq.s32.totalorder %v250, %v287
        %vm443 = vcmp.eq.s32.totalorder %v251, %v287
        %vm444 = vcmp.eq.s32.totalorder %v244, %v290
        %vm445 = vcmp.eq.s32.totalorder %v245, %v290
        %vm446 = vcmp.eq.s32.totalorder %v246, %v290
        %vm447 = vcmp.eq.s32.totalorder %v247, %v290
        %vm448 = vcmp.eq.s32.totalorder %v248, %v290
        %vm449 = vcmp.eq.s32.totalorder %v249, %v290
        %vm450 = vcmp.eq.s32.totalorder %v250, %v290
        %vm451 = vcmp.eq.s32.totalorder %v251, %v290
        %vm452 = vcmp.eq.s32.totalorder %v244, %v293
        %vm453 = vcmp.eq.s32.totalorder %v245, %v293
        %vm454 = vcmp.eq.s32.totalorder %v246, %v293
        %vm455 = vcmp.eq.s32.totalorder %v247, %v293
        %vm456 = vcmp.eq.s32.totalorder %v248, %v293
        %vm457 = vcmp.eq.s32.totalorder %v249, %v293
        %vm458 = vcmp.eq.s32.totalorder %v250, %v293
        %vm459 = vcmp.eq.s32.totalorder %v251, %v293
        %vm460 = vcmp.eq.s32.totalorder %v244, %v296
        %vm461 = vcmp.eq.s32.totalorder %v245, %v296
        %vm462 = vcmp.eq.s32.totalorder %v246, %v296
        %vm463 = vcmp.eq.s32.totalorder %v247, %v296
        %vm464 = vcmp.eq.s32.totalorder %v248, %v296
        %vm465 = vcmp.eq.s32.totalorder %v249, %v296
        %vm466 = vcmp.eq.s32.totalorder %v250, %v296
        %vm467 = vcmp.eq.s32.totalorder %v251, %v296
        %vm468 = vcmp.eq.s32.totalorder %v244, %v299
        %vm469 = vcmp.eq.s32.totalorder %v245, %v299
        %vm470 = vcmp.eq.s32.totalorder %v246, %v299
        %vm471 = vcmp.eq.s32.totalorder %v247, %v299
        %vm472 = vcmp.eq.s32.totalorder %v248, %v299
        %vm473 = vcmp.eq.s32.totalorder %v249, %v299
        %vm474 = vcmp.eq.s32.totalorder %v250, %v299
        %vm475 = vcmp.eq.s32.totalorder %v251, %v299
        %vm476 = vcmp.eq.s32.totalorder %v244, %v302
        %vm477 = vcmp.eq.s32.totalorder %v245, %v302
        %vm478 = vcmp.eq.s32.totalorder %v246, %v302
        %vm479 = vcmp.eq.s32.totalorder %v247, %v302
        %vm480 = vcmp.eq.s32.totalorder %v248, %v302
        %vm481 = vcmp.eq.s32.totalorder %v249, %v302
        %vm482 = vcmp.eq.s32.totalorder %v250, %v302
        %vm483 = vcmp.eq.s32.totalorder %v251, %v302
        %vm484 = vcmp.eq.s32.totalorder %v244, %v305
        %vm485 = vcmp.eq.s32.totalorder %v245, %v305
        %vm486 = vcmp.eq.s32.totalorder %v246, %v305
        %vm487 = vcmp.eq.s32.totalorder %v247, %v305
        %vm488 = vcmp.eq.s32.totalorder %v248, %v305
        %vm489 = vcmp.eq.s32.totalorder %v249, %v305
        %vm490 = vcmp.eq.s32.totalorder %v250, %v305
        %vm491 = vcmp.eq.s32.totalorder %v251, %v305
        %vm492 = vcmp.eq.s32.totalorder %v244, %v308
        %vm493 = vcmp.eq.s32.totalorder %v245, %v308
        %vm494 = vcmp.eq.s32.totalorder %v246, %v308
        %vm495 = vcmp.eq.s32.totalorder %v247, %v308
        %vm496 = vcmp.eq.s32.totalorder %v248, %v308
        %vm497 = vcmp.eq.s32.totalorder %v249, %v308
        %vm498 = vcmp.eq.s32.totalorder %v250, %v308
        %vm499 = vcmp.eq.s32.totalorder %v251, %v308
        %vm500 = vcmp.eq.s32.totalorder %v244, %v311
        %vm501 = vcmp.eq.s32.totalorder %v245, %v311
        %vm502 = vcmp.eq.s32.totalorder %v246, %v311
        %vm503 = vcmp.eq.s32.totalorder %v247, %v311
        %vm504 = vcmp.eq.s32.totalorder %v248, %v311
        %vm505 = vcmp.eq.s32.totalorder %v249, %v311
        %vm506 = vcmp.eq.s32.totalorder %v250, %v311
        %vm507 = vcmp.eq.s32.totalorder %v251, %v311
        %vm508 = vcmp.eq.s32.totalorder %v244, %v314
        %vm509 = vcmp.eq.s32.totalorder %v245, %v314
        %vm510 = vcmp.eq.s32.totalorder %v246, %v314
        %vm511 = vcmp.eq.s32.totalorder %v247, %v314
        %vm512 = vcmp.eq.s32.totalorder %v248, %v314
        %vm513 = vcmp.eq.s32.totalorder %v249, %v314
        %vm514 = vcmp.eq.s32.totalorder %v250, %v314
        %vm515 = vcmp.eq.s32.totalorder %v251, %v314
        %vm516 = vcmp.eq.s32.totalorder %v244, %v317
        %vm517 = vcmp.eq.s32.totalorder %v245, %v317
        %vm518 = vcmp.eq.s32.totalorder %v246, %v317
        %vm519 = vcmp.eq.s32.totalorder %v247, %v317
        %vm520 = vcmp.eq.s32.totalorder %v248, %v317
        %vm521 = vcmp.eq.s32.totalorder %v249, %v317
        %vm522 = vcmp.eq.s32.totalorder %v250, %v317
        %vm523 = vcmp.eq.s32.totalorder %v251, %v317
        %vm524 = vcmp.eq.s32.totalorder %v244, %v320
        %vm525 = vcmp.eq.s32.totalorder %v245, %v320
        %vm526 = vcmp.eq.s32.totalorder %v246, %v320
        %vm527 = vcmp.eq.s32.totalorder %v247, %v320
        %vm528 = vcmp.eq.s32.totalorder %v248, %v320
        %vm529 = vcmp.eq.s32.totalorder %v249, %v320
        %vm530 = vcmp.eq.s32.totalorder %v250, %v320
        %vm531 = vcmp.eq.s32.totalorder %v251, %v320
        %vm532 = vcmp.eq.s32.totalorder %v244, %v323
        %vm533 = vcmp.eq.s32.totalorder %v245, %v323
        %vm534 = vcmp.eq.s32.totalorder %v246, %v323
        %vm535 = vcmp.eq.s32.totalorder %v247, %v323
        %vm536 = vcmp.eq.s32.totalorder %v248, %v323
        %vm537 = vcmp.eq.s32.totalorder %v249, %v323
        %vm538 = vcmp.eq.s32.totalorder %v250, %v323
        %vm539 = vcmp.eq.s32.totalorder %v251, %v323
        %vm540 = vcmp.eq.s32.totalorder %v244, %v326
        %vm541 = vcmp.eq.s32.totalorder %v245, %v326
        %vm542 = vcmp.eq.s32.totalorder %v246, %v326
        %vm543 = vcmp.eq.s32.totalorder %v247, %v326
        %vm544 = vcmp.eq.s32.totalorder %v248, %v326
        %vm545 = vcmp.eq.s32.totalorder %v249, %v326
        %vm546 = vcmp.eq.s32.totalorder %v250, %v326
        %vm547 = vcmp.eq.s32.totalorder %v251, %v326
        %vm548 = vcmp.eq.s32.totalorder %v244, %v329
        %vm549 = vcmp.eq.s32.totalorder %v245, %v329
        %vm550 = vcmp.eq.s32.totalorder %v246, %v329
        %vm551 = vcmp.eq.s32.totalorder %v247, %v329
        %vm552 = vcmp.eq.s32.totalorder %v248, %v329
        %vm553 = vcmp.eq.s32.totalorder %v249, %v329
        %vm554 = vcmp.eq.s32.totalorder %v250, %v329
        %vm555 = vcmp.eq.s32.totalorder %v251, %v329
        %vm556 = vcmp.eq.s32.totalorder %v244, %v332
        %vm557 = vcmp.eq.s32.totalorder %v245, %v332
        %vm558 = vcmp.eq.s32.totalorder %v246, %v332
        %vm559 = vcmp.eq.s32.totalorder %v247, %v332
        %vm560 = vcmp.eq.s32.totalorder %v248, %v332
        %vm561 = vcmp.eq.s32.totalorder %v249, %v332
        %vm562 = vcmp.eq.s32.totalorder %v250, %v332
        %vm563 = vcmp.eq.s32.totalorder %v251, %v332
        %vm564 = vcmp.eq.s32.totalorder %v244, %v335
        %vm565 = vcmp.eq.s32.totalorder %v245, %v335
        %vm566 = vcmp.eq.s32.totalorder %v246, %v335
        %vm567 = vcmp.eq.s32.totalorder %v247, %v335
        %vm568 = vcmp.eq.s32.totalorder %v248, %v335
        %vm569 = vcmp.eq.s32.totalorder %v249, %v335
        %vm570 = vcmp.eq.s32.totalorder %v250, %v335
        %vm571 = vcmp.eq.s32.totalorder %v251, %v335
        %vm572 = vcmp.eq.s32.totalorder %v244, %v338
        %vm573 = vcmp.eq.s32.totalorder %v245, %v338
        %vm574 = vcmp.eq.s32.totalorder %v246, %v338
        %vm575 = vcmp.eq.s32.totalorder %v247, %v338
        %vm576 = vcmp.eq.s32.totalorder %v248, %v338
        %vm577 = vcmp.eq.s32.totalorder %v249, %v338
        %vm578 = vcmp.eq.s32.totalorder %v250, %v338
        %vm579 = vcmp.eq.s32.totalorder %v251, %v338
        %vm580 = vcmp.eq.s32.totalorder %v244, %v341
        %vm581 = vcmp.eq.s32.totalorder %v245, %v341
        %vm582 = vcmp.eq.s32.totalorder %v246, %v341
        %vm583 = vcmp.eq.s32.totalorder %v247, %v341
        %vm584 = vcmp.eq.s32.totalorder %v248, %v341
        %vm585 = vcmp.eq.s32.totalorder %v249, %v341
        %vm586 = vcmp.eq.s32.totalorder %v250, %v341
        %vm587 = vcmp.eq.s32.totalorder %v251, %v341
        %vm588 = vcmp.eq.s32.totalorder %v244, %v344
        %vm589 = vcmp.eq.s32.totalorder %v245, %v344
        %vm590 = vcmp.eq.s32.totalorder %v246, %v344
        %vm591 = vcmp.eq.s32.totalorder %v247, %v344
        %vm592 = vcmp.eq.s32.totalorder %v248, %v344
        %vm593 = vcmp.eq.s32.totalorder %v249, %v344
        %vm594 = vcmp.eq.s32.totalorder %v250, %v344
        %vm595 = vcmp.eq.s32.totalorder %v251, %v344
        %vm596 = vcmp.eq.s32.totalorder %v244, %v347
        %vm597 = vcmp.eq.s32.totalorder %v245, %v347
        %vm598 = vcmp.eq.s32.totalorder %v246, %v347
        %vm599 = vcmp.eq.s32.totalorder %v247, %v347
        %vm600 = vcmp.eq.s32.totalorder %v248, %v347
        %vm601 = vcmp.eq.s32.totalorder %v249, %v347
        %vm602 = vcmp.eq.s32.totalorder %v250, %v347
        %vm603 = vcmp.eq.s32.totalorder %v251, %v347
        %604 = vset.pattern.permute.xlu0 1
        %605 = vperm.xlu0 %604, %v211
        %v606 = vpop.permute.xlu0 %605
        %607 = vset.pattern.permute.xlu0 1
        %608 = vperm.xlu0 %607, %v212
        %v609 = vpop.permute.xlu0 %608
        %610 = vset.pattern.permute.xlu0 1
        %611 = vperm.xlu0 %610, %v213
        %v612 = vpop.permute.xlu0 %611
        %613 = vset.pattern.permute.xlu0 1
        %614 = vperm.xlu0 %613, %v214
        %v615 = vpop.permute.xlu0 %614
        %616 = vset.pattern.permute.xlu0 1
        %617 = vperm.xlu0 %616, %v215
        %v618 = vpop.permute.xlu0 %617
        %619 = vset.pattern.permute.xlu0 1
        %620 = vperm.xlu0 %619, %v216
        %v621 = vpop.permute.xlu0 %620
        %622 = vset.pattern.permute.xlu0 1
        %623 = vperm.xlu0 %622, %v217
        %v624 = vpop.permute.xlu0 %623
        %625 = vset.pattern.permute.xlu0 1
        %626 = vperm.xlu0 %625, %v218
        %v627 = vpop.permute.xlu0 %626
        %628 = vset.pattern.permute.xlu0 1
        %629 = vperm.xlu0 %628, %v219
        %v630 = vpop.permute.xlu0 %629
        %631 = vset.pattern.permute.xlu0 1
        %632 = vperm.xlu0 %631, %v220
        %v633 = vpop.permute.xlu0 %632
        %634 = vset.pattern.permute.xlu0 1
        %635 = vperm.xlu0 %634, %v221
        %v636 = vpop.permute.xlu0 %635
        %637 = vset.pattern.permute.xlu0 1
        %638 = vperm.xlu0 %637, %v222
        %v639 = vpop.permute.xlu0 %638
        %640 = vset.pattern.permute.xlu0 1
        %641 = vperm.xlu0 %640, %v223
        %v642 = vpop.permute.xlu0 %641
        %643 = vset.pattern.permute.xlu0 1
        %644 = vperm.xlu0 %643, %v224
        %v645 = vpop.permute.xlu0 %644
        %646 = vset.pattern.permute.xlu0 1
        %647 = vperm.xlu0 %646, %v225
        %v648 = vpop.permute.xlu0 %647
        %649 = vset.pattern.permute.xlu0 1
        %650 = vperm.xlu0 %649, %v226
        %v651 = vpop.permute.xlu0 %650
        %652 = vset.pattern.permute.xlu0 1
        %653 = vperm.xlu0 %652, %v227
        %v654 = vpop.permute.xlu0 %653
        %655 = vset.pattern.permute.xlu0 1
        %656 = vperm.xlu0 %655, %v228
        %v657 = vpop.permute.xlu0 %656
        %658 = vset.pattern.permute.xlu0 1
        %659 = vperm.xlu0 %658, %v229
        %v660 = vpop.permute.xlu0 %659
        %661 = vset.pattern.permute.xlu0 1
        %662 = vperm.xlu0 %661, %v230
        %v663 = vpop.permute.xlu0 %662
        %664 = vset.pattern.permute.xlu0 1
        %665 = vperm.xlu0 %664, %v231
        %v666 = vpop.permute.xlu0 %665
        %667 = vset.pattern.permute.xlu0 1
        %668 = vperm.xlu0 %667, %v232
        %v669 = vpop.permute.xlu0 %668
        %670 = vset.pattern.permute.xlu0 1
        %671 = vperm.xlu0 %670, %v233
        %v672 = vpop.permute.xlu0 %671
        %673 = vset.pattern.permute.xlu0 1
        %674 = vperm.xlu0 %673, %v234
        %v675 = vpop.permute.xlu0 %674
        %676 = vset.pattern.permute.xlu0 1
        %677 = vperm.xlu0 %676, %v235
        %v678 = vpop.permute.xlu0 %677
        %679 = vset.pattern.permute.xlu0 1
        %680 = vperm.xlu0 %679, %v236
        %v681 = vpop.permute.xlu0 %680
        %682 = vset.pattern.permute.xlu0 1
        %683 = vperm.xlu0 %682, %v237
        %v684 = vpop.permute.xlu0 %683
        %685 = vset.pattern.permute.xlu0 1
        %686 = vperm.xlu0 %685, %v238
        %v687 = vpop.permute.xlu0 %686
        %688 = vset.pattern.permute.xlu0 1
        %689 = vperm.xlu0 %688, %v239
        %v690 = vpop.permute.xlu0 %689
        %691 = vset.pattern.permute.xlu0 1
        %692 = vperm.xlu0 %691, %v240
        %v693 = vpop.permute.xlu0 %692
        %694 = vset.pattern.permute.xlu0 1
        %695 = vperm.xlu0 %694, %v241
        %v696 = vpop.permute.xlu0 %695
        %697 = vset.pattern.permute.xlu0 1
        %698 = vperm.xlu0 %697, %v242
        %v699 = vpop.permute.xlu0 %698
        %vm700 = vcmp.eq.s32.totalorder %v244, %v606
        %vm701 = vcmp.eq.s32.totalorder %v245, %v606
        %vm702 = vcmp.eq.s32.totalorder %v246, %v606
        %vm703 = vcmp.eq.s32.totalorder %v247, %v606
        %vm704 = vcmp.eq.s32.totalorder %v248, %v606
        %vm705 = vcmp.eq.s32.totalorder %v249, %v606
        %vm706 = vcmp.eq.s32.totalorder %v250, %v606
        %vm707 = vcmp.eq.s32.totalorder %v251, %v606
        %vm708 = vcmp.eq.s32.totalorder %v244, %v609
        %vm709 = vcmp.eq.s32.totalorder %v245, %v609
        %vm710 = vcmp.eq.s32.totalorder %v246, %v609
        %vm711 = vcmp.eq.s32.totalorder %v247, %v609
        %vm712 = vcmp.eq.s32.totalorder %v248, %v609
        %vm713 = vcmp.eq.s32.totalorder %v249, %v609
        %vm714 = vcmp.eq.s32.totalorder %v250, %v609
        %vm715 = vcmp.eq.s32.totalorder %v251, %v609
        %vm716 = vcmp.eq.s32.totalorder %v244, %v612
        %vm717 = vcmp.eq.s32.totalorder %v245, %v612
        %vm718 = vcmp.eq.s32.totalorder %v246, %v612
        %vm719 = vcmp.eq.s32.totalorder %v247, %v612
        %vm720 = vcmp.eq.s32.totalorder %v248, %v612
        %vm721 = vcmp.eq.s32.totalorder %v249, %v612
        %vm722 = vcmp.eq.s32.totalorder %v250, %v612
        %vm723 = vcmp.eq.s32.totalorder %v251, %v612
        %vm724 = vcmp.eq.s32.totalorder %v244, %v615
        %vm725 = vcmp.eq.s32.totalorder %v245, %v615
        %vm726 = vcmp.eq.s32.totalorder %v246, %v615
        %vm727 = vcmp.eq.s32.totalorder %v247, %v615
        %vm728 = vcmp.eq.s32.totalorder %v248, %v615
        %vm729 = vcmp.eq.s32.totalorder %v249, %v615
        %vm730 = vcmp.eq.s32.totalorder %v250, %v615
        %vm731 = vcmp.eq.s32.totalorder %v251, %v615
        %vm732 = vcmp.eq.s32.totalorder %v244, %v618
        %vm733 = vcmp.eq.s32.totalorder %v245, %v618
        %vm734 = vcmp.eq.s32.totalorder %v246, %v618
        %vm735 = vcmp.eq.s32.totalorder %v247, %v618
        %vm736 = vcmp.eq.s32.totalorder %v248, %v618
        %vm737 = vcmp.eq.s32.totalorder %v249, %v618
        %vm738 = vcmp.eq.s32.totalorder %v250, %v618
        %vm739 = vcmp.eq.s32.totalorder %v251, %v618
        %vm740 = vcmp.eq.s32.totalorder %v244, %v621
        %vm741 = vcmp.eq.s32.totalorder %v245, %v621
        %vm742 = vcmp.eq.s32.totalorder %v246, %v621
        %vm743 = vcmp.eq.s32.totalorder %v247, %v621
        %vm744 = vcmp.eq.s32.totalorder %v248, %v621
        %vm745 = vcmp.eq.s32.totalorder %v249, %v621
        %vm746 = vcmp.eq.s32.totalorder %v250, %v621
        %vm747 = vcmp.eq.s32.totalorder %v251, %v621
        %vm748 = vcmp.eq.s32.totalorder %v244, %v624
        %vm749 = vcmp.eq.s32.totalorder %v245, %v624
        %vm750 = vcmp.eq.s32.totalorder %v246, %v624
        %vm751 = vcmp.eq.s32.totalorder %v247, %v624
        %vm752 = vcmp.eq.s32.totalorder %v248, %v624
        %vm753 = vcmp.eq.s32.totalorder %v249, %v624
        %vm754 = vcmp.eq.s32.totalorder %v250, %v624
        %vm755 = vcmp.eq.s32.totalorder %v251, %v624
        %vm756 = vcmp.eq.s32.totalorder %v244, %v627
        %vm757 = vcmp.eq.s32.totalorder %v245, %v627
        %vm758 = vcmp.eq.s32.totalorder %v246, %v627
        %vm759 = vcmp.eq.s32.totalorder %v247, %v627
        %vm760 = vcmp.eq.s32.totalorder %v248, %v627
        %vm761 = vcmp.eq.s32.totalorder %v249, %v627
        %vm762 = vcmp.eq.s32.totalorder %v250, %v627
        %vm763 = vcmp.eq.s32.totalorder %v251, %v627
        %vm764 = vcmp.eq.s32.totalorder %v244, %v630
        %vm765 = vcmp.eq.s32.totalorder %v245, %v630
        %vm766 = vcmp.eq.s32.totalorder %v246, %v630
        %vm767 = vcmp.eq.s32.totalorder %v247, %v630
        %vm768 = vcmp.eq.s32.totalorder %v248, %v630
        %vm769 = vcmp.eq.s32.totalorder %v249, %v630
        %vm770 = vcmp.eq.s32.totalorder %v250, %v630
        %vm771 = vcmp.eq.s32.totalorder %v251, %v630
        %vm772 = vcmp.eq.s32.totalorder %v244, %v633
        %vm773 = vcmp.eq.s32.totalorder %v245, %v633
        %vm774 = vcmp.eq.s32.totalorder %v246, %v633
        %vm775 = vcmp.eq.s32.totalorder %v247, %v633
        %vm776 = vcmp.eq.s32.totalorder %v248, %v633
        %vm777 = vcmp.eq.s32.totalorder %v249, %v633
        %vm778 = vcmp.eq.s32.totalorder %v250, %v633
        %vm779 = vcmp.eq.s32.totalorder %v251, %v633
        %vm780 = vcmp.eq.s32.totalorder %v244, %v636
        %vm781 = vcmp.eq.s32.totalorder %v245, %v636
        %vm782 = vcmp.eq.s32.totalorder %v246, %v636
        %vm783 = vcmp.eq.s32.totalorder %v247, %v636
        %vm784 = vcmp.eq.s32.totalorder %v248, %v636
        %vm785 = vcmp.eq.s32.totalorder %v249, %v636
        %vm786 = vcmp.eq.s32.totalorder %v250, %v636
        %vm787 = vcmp.eq.s32.totalorder %v251, %v636
        %vm788 = vcmp.eq.s32.totalorder %v244, %v639
        %vm789 = vcmp.eq.s32.totalorder %v245, %v639
        %vm790 = vcmp.eq.s32.totalorder %v246, %v639
        %vm791 = vcmp.eq.s32.totalorder %v247, %v639
        %vm792 = vcmp.eq.s32.totalorder %v248, %v639
        %vm793 = vcmp.eq.s32.totalorder %v249, %v639
        %vm794 = vcmp.eq.s32.totalorder %v250, %v639
        %vm795 = vcmp.eq.s32.totalorder %v251, %v639
        %vm796 = vcmp.eq.s32.totalorder %v244, %v642
        %vm797 = vcmp.eq.s32.totalorder %v245, %v642
        %vm798 = vcmp.eq.s32.totalorder %v246, %v642
        %vm799 = vcmp.eq.s32.totalorder %v247, %v642
        %vm800 = vcmp.eq.s32.totalorder %v248, %v642
        %vm801 = vcmp.eq.s32.totalorder %v249, %v642
        %vm802 = vcmp.eq.s32.totalorder %v250, %v642
        %vm803 = vcmp.eq.s32.totalorder %v251, %v642
        %vm804 = vcmp.eq.s32.totalorder %v244, %v645
        %vm805 = vcmp.eq.s32.totalorder %v245, %v645
        %vm806 = vcmp.eq.s32.totalorder %v246, %v645
        %vm807 = vcmp.eq.s32.totalorder %v247, %v645
        %vm808 = vcmp.eq.s32.totalorder %v248, %v645
        %vm809 = vcmp.eq.s32.totalorder %v249, %v645
        %vm810 = vcmp.eq.s32.totalorder %v250, %v645
        %vm811 = vcmp.eq.s32.totalorder %v251, %v645
        %vm812 = vcmp.eq.s32.totalorder %v244, %v648
        %vm813 = vcmp.eq.s32.totalorder %v245, %v648
        %vm814 = vcmp.eq.s32.totalorder %v246, %v648
        %vm815 = vcmp.eq.s32.totalorder %v247, %v648
        %vm816 = vcmp.eq.s32.totalorder %v248, %v648
        %vm817 = vcmp.eq.s32.totalorder %v249, %v648
        %vm818 = vcmp.eq.s32.totalorder %v250, %v648
        %vm819 = vcmp.eq.s32.totalorder %v251, %v648
        %vm820 = vcmp.eq.s32.totalorder %v244, %v651
        %vm821 = vcmp.eq.s32.totalorder %v245, %v651
        %vm822 = vcmp.eq.s32.totalorder %v246, %v651
        %vm823 = vcmp.eq.s32.totalorder %v247, %v651
        %vm824 = vcmp.eq.s32.totalorder %v248, %v651
        %vm825 = vcmp.eq.s32.totalorder %v249, %v651
        %vm826 = vcmp.eq.s32.totalorder %v250, %v651
        %vm827 = vcmp.eq.s32.totalorder %v251, %v651
        %vm828 = vcmp.eq.s32.totalorder %v244, %v654
        %vm829 = vcmp.eq.s32.totalorder %v245, %v654
        %vm830 = vcmp.eq.s32.totalorder %v246, %v654
        %vm831 = vcmp.eq.s32.totalorder %v247, %v654
        %vm832 = vcmp.eq.s32.totalorder %v248, %v654
        %vm833 = vcmp.eq.s32.totalorder %v249, %v654
        %vm834 = vcmp.eq.s32.totalorder %v250, %v654
        %vm835 = vcmp.eq.s32.totalorder %v251, %v654
        %vm836 = vcmp.eq.s32.totalorder %v244, %v657
        %vm837 = vcmp.eq.s32.totalorder %v245, %v657
        %vm838 = vcmp.eq.s32.totalorder %v246, %v657
        %vm839 = vcmp.eq.s32.totalorder %v247, %v657
        %vm840 = vcmp.eq.s32.totalorder %v248, %v657
        %vm841 = vcmp.eq.s32.totalorder %v249, %v657
        %vm842 = vcmp.eq.s32.totalorder %v250, %v657
        %vm843 = vcmp.eq.s32.totalorder %v251, %v657
        %vm844 = vcmp.eq.s32.totalorder %v244, %v660
        %vm845 = vcmp.eq.s32.totalorder %v245, %v660
        %vm846 = vcmp.eq.s32.totalorder %v246, %v660
        %vm847 = vcmp.eq.s32.totalorder %v247, %v660
        %vm848 = vcmp.eq.s32.totalorder %v248, %v660
        %vm849 = vcmp.eq.s32.totalorder %v249, %v660
        %vm850 = vcmp.eq.s32.totalorder %v250, %v660
        %vm851 = vcmp.eq.s32.totalorder %v251, %v660
        %vm852 = vcmp.eq.s32.totalorder %v244, %v663
        %vm853 = vcmp.eq.s32.totalorder %v245, %v663
        %vm854 = vcmp.eq.s32.totalorder %v246, %v663
        %vm855 = vcmp.eq.s32.totalorder %v247, %v663
        %vm856 = vcmp.eq.s32.totalorder %v248, %v663
        %vm857 = vcmp.eq.s32.totalorder %v249, %v663
        %vm858 = vcmp.eq.s32.totalorder %v250, %v663
        %vm859 = vcmp.eq.s32.totalorder %v251, %v663
        %vm860 = vcmp.eq.s32.totalorder %v244, %v666
        %vm861 = vcmp.eq.s32.totalorder %v245, %v666
        %vm862 = vcmp.eq.s32.totalorder %v246, %v666
        %vm863 = vcmp.eq.s32.totalorder %v247, %v666
        %vm864 = vcmp.eq.s32.totalorder %v248, %v666
        %vm865 = vcmp.eq.s32.totalorder %v249, %v666
        %vm866 = vcmp.eq.s32.totalorder %v250, %v666
        %vm867 = vcmp.eq.s32.totalorder %v251, %v666
        %vm868 = vcmp.eq.s32.totalorder %v244, %v669
        %vm869 = vcmp.eq.s32.totalorder %v245, %v669
        %vm870 = vcmp.eq.s32.totalorder %v246, %v669
        %vm871 = vcmp.eq.s32.totalorder %v247, %v669
        %vm872 = vcmp.eq.s32.totalorder %v248, %v669
        %vm873 = vcmp.eq.s32.totalorder %v249, %v669
        %vm874 = vcmp.eq.s32.totalorder %v250, %v669
        %vm875 = vcmp.eq.s32.totalorder %v251, %v669
        %vm876 = vcmp.eq.s32.totalorder %v244, %v672
        %vm877 = vcmp.eq.s32.totalorder %v245, %v672
        %vm878 = vcmp.eq.s32.totalorder %v246, %v672
        %vm879 = vcmp.eq.s32.totalorder %v247, %v672
        %vm880 = vcmp.eq.s32.totalorder %v248, %v672
        %vm881 = vcmp.eq.s32.totalorder %v249, %v672
        %vm882 = vcmp.eq.s32.totalorder %v250, %v672
        %vm883 = vcmp.eq.s32.totalorder %v251, %v672
        %vm884 = vcmp.eq.s32.totalorder %v244, %v675
        %vm885 = vcmp.eq.s32.totalorder %v245, %v675
        %vm886 = vcmp.eq.s32.totalorder %v246, %v675
        %vm887 = vcmp.eq.s32.totalorder %v247, %v675
        %vm888 = vcmp.eq.s32.totalorder %v248, %v675
        %vm889 = vcmp.eq.s32.totalorder %v249, %v675
        %vm890 = vcmp.eq.s32.totalorder %v250, %v675
        %vm891 = vcmp.eq.s32.totalorder %v251, %v675
        %vm892 = vcmp.eq.s32.totalorder %v244, %v678
        %vm893 = vcmp.eq.s32.totalorder %v245, %v678
        %vm894 = vcmp.eq.s32.totalorder %v246, %v678
        %vm895 = vcmp.eq.s32.totalorder %v247, %v678
        %vm896 = vcmp.eq.s32.totalorder %v248, %v678
        %vm897 = vcmp.eq.s32.totalorder %v249, %v678
        %vm898 = vcmp.eq.s32.totalorder %v250, %v678
        %vm899 = vcmp.eq.s32.totalorder %v251, %v678
        %vm900 = vcmp.eq.s32.totalorder %v244, %v681
        %vm901 = vcmp.eq.s32.totalorder %v245, %v681
        %vm902 = vcmp.eq.s32.totalorder %v246, %v681
        %vm903 = vcmp.eq.s32.totalorder %v247, %v681
        %vm904 = vcmp.eq.s32.totalorder %v248, %v681
        %vm905 = vcmp.eq.s32.totalorder %v249, %v681
        %vm906 = vcmp.eq.s32.totalorder %v250, %v681
        %vm907 = vcmp.eq.s32.totalorder %v251, %v681
        %vm908 = vcmp.eq.s32.totalorder %v244, %v684
        %vm909 = vcmp.eq.s32.totalorder %v245, %v684
        %vm910 = vcmp.eq.s32.totalorder %v246, %v684
        %vm911 = vcmp.eq.s32.totalorder %v247, %v684
        %vm912 = vcmp.eq.s32.totalorder %v248, %v684
        %vm913 = vcmp.eq.s32.totalorder %v249, %v684
        %vm914 = vcmp.eq.s32.totalorder %v250, %v684
        %vm915 = vcmp.eq.s32.totalorder %v251, %v684
        %vm916 = vcmp.eq.s32.totalorder %v244, %v687
        %vm917 = vcmp.eq.s32.totalorder %v245, %v687
        %vm918 = vcmp.eq.s32.totalorder %v246, %v687
        %vm919 = vcmp.eq.s32.totalorder %v247, %v687
        %vm920 = vcmp.eq.s32.totalorder %v248, %v687
        %vm921 = vcmp.eq.s32.totalorder %v249, %v687
        %vm922 = vcmp.eq.s32.totalorder %v250, %v687
        %vm923 = vcmp.eq.s32.totalorder %v251, %v687
        %vm924 = vcmp.eq.s32.totalorder %v244, %v690
        %vm925 = vcmp.eq.s32.totalorder %v245, %v690
        %vm926 = vcmp.eq.s32.totalorder %v246, %v690
        %vm927 = vcmp.eq.s32.totalorder %v247, %v690
        %vm928 = vcmp.eq.s32.totalorder %v248, %v690
        %vm929 = vcmp.eq.s32.totalorder %v249, %v690
        %vm930 = vcmp.eq.s32.totalorder %v250, %v690
        %vm931 = vcmp.eq.s32.totalorder %v251, %v690
        %vm932 = vcmp.eq.s32.totalorder %v244, %v693
        %vm933 = vcmp.eq.s32.totalorder %v245, %v693
        %vm934 = vcmp.eq.s32.totalorder %v246, %v693
        %vm935 = vcmp.eq.s32.totalorder %v247, %v693
        %vm936 = vcmp.eq.s32.totalorder %v248, %v693
        %vm937 = vcmp.eq.s32.totalorder %v249, %v693
        %vm938 = vcmp.eq.s32.totalorder %v250, %v693
        %vm939 = vcmp.eq.s32.totalorder %v251, %v693
        %vm940 = vcmp.eq.s32.totalorder %v244, %v696
        %vm941 = vcmp.eq.s32.totalorder %v245, %v696
        %vm942 = vcmp.eq.s32.totalorder %v246, %v696
        %vm943 = vcmp.eq.s32.totalorder %v247, %v696
        %vm944 = vcmp.eq.s32.totalorder %v248, %v696
        %vm945 = vcmp.eq.s32.totalorder %v249, %v696
        %vm946 = vcmp.eq.s32.totalorder %v250, %v696
        %vm947 = vcmp.eq.s32.totalorder %v251, %v696
        %vm948 = vcmp.eq.s32.totalorder %v244, %v699
        %vm949 = vcmp.eq.s32.totalorder %v245, %v699
        %vm950 = vcmp.eq.s32.totalorder %v246, %v699
        %vm951 = vcmp.eq.s32.totalorder %v247, %v699
        %vm952 = vcmp.eq.s32.totalorder %v248, %v699
        %vm953 = vcmp.eq.s32.totalorder %v249, %v699
        %vm954 = vcmp.eq.s32.totalorder %v250, %v699
        %vm955 = vcmp.eq.s32.totalorder %v251, %v699
        %vm956 = vmor %vm348, %vm700
        %vm957 = vmor %vm349, %vm701
        %vm958 = vmor %vm350, %vm702
        %vm959 = vmor %vm351, %vm703
        %vm960 = vmor %vm352, %vm704
        %vm961 = vmor %vm353, %vm705
        %vm962 = vmor %vm354, %vm706
        %vm963 = vmor %vm355, %vm707
        %vm964 = vmor %vm356, %vm708
        %vm965 = vmor %vm357, %vm709
        %vm966 = vmor %vm358, %vm710
        %vm967 = vmor %vm359, %vm711
        %vm968 = vmor %vm360, %vm712
        %vm969 = vmor %vm361, %vm713
        %vm970 = vmor %vm362, %vm714
        %vm971 = vmor %vm363, %vm715
        %vm972 = vmor %vm364, %vm716
        %vm973 = vmor %vm365, %vm717
        %vm974 = vmor %vm366, %vm718
        %vm975 = vmor %vm367, %vm719
        %vm976 = vmor %vm368, %vm720
        %vm977 = vmor %vm369, %vm721
        %vm978 = vmor %vm370, %vm722
        %vm979 = vmor %vm371, %vm723
        %vm980 = vmor %vm372, %vm724
        %vm981 = vmor %vm373, %vm725
        %vm982 = vmor %vm374, %vm726
        %vm983 = vmor %vm375, %vm727
        %vm984 = vmor %vm376, %vm728
        %vm985 = vmor %vm377, %vm729
        %vm986 = vmor %vm378, %vm730
        %vm987 = vmor %vm379, %vm731
        %vm988 = vmor %vm380, %vm732
        %vm989 = vmor %vm381, %vm733
        %vm990 = vmor %vm382, %vm734
        %vm991 = vmor %vm383, %vm735
        %vm992 = vmor %vm384, %vm736
        %vm993 = vmor %vm385, %vm737
        %vm994 = vmor %vm386, %vm738
        %vm995 = vmor %vm387, %vm739
        %vm996 = vmor %vm388, %vm740
        %vm997 = vmor %vm389, %vm741
        %vm998 = vmor %vm390, %vm742
        %vm999 = vmor %vm391, %vm743
        %vm1000 = vmor %vm392, %vm744
        %vm1001 = vmor %vm393, %vm745
        %vm1002 = vmor %vm394, %vm746
        %vm1003 = vmor %vm395, %vm747
        %vm1004 = vmor %vm396, %vm748
        %vm1005 = vmor %vm397, %vm749
        %vm1006 = vmor %vm398, %vm750
        %vm1007 = vmor %vm399, %vm751
        %vm1008 = vmor %vm400, %vm752
        %vm1009 = vmor %vm401, %vm753
        %vm1010 = vmor %vm402, %vm754
        %vm1011 = vmor %vm403, %vm755
        %vm1012 = vmor %vm404, %vm756
        %vm1013 = vmor %vm405, %vm757
        %vm1014 = vmor %vm406, %vm758
        %vm1015 = vmor %vm407, %vm759
        %vm1016 = vmor %vm408, %vm760
        %vm1017 = vmor %vm409, %vm761
        %vm1018 = vmor %vm410, %vm762
        %vm1019 = vmor %vm411, %vm763
        %vm1020 = vmor %vm412, %vm764
        %vm1021 = vmor %vm413, %vm765
        %vm1022 = vmor %vm414, %vm766
        %vm1023 = vmor %vm415, %vm767
        %vm1024 = vmor %vm416, %vm768
        %vm1025 = vmor %vm417, %vm769
        %vm1026 = vmor %vm418, %vm770
        %vm1027 = vmor %vm419, %vm771
        %vm1028 = vmor %vm420, %vm772
        %vm1029 = vmor %vm421, %vm773
        %vm1030 = vmor %vm422, %vm774
        %vm1031 = vmor %vm423, %vm775
        %vm1032 = vmor %vm424, %vm776
        %vm1033 = vmor %vm425, %vm777
        %vm1034 = vmor %vm426, %vm778
        %vm1035 = vmor %vm427, %vm779
        %vm1036 = vmor %vm428, %vm780
        %vm1037 = vmor %vm429, %vm781
        %vm1038 = vmor %vm430, %vm782
        %vm1039 = vmor %vm431, %vm783
        %vm1040 = vmor %vm432, %vm784
        %vm1041 = vmor %vm433, %vm785
        %vm1042 = vmor %vm434, %vm786
        %vm1043 = vmor %vm435, %vm787
        %vm1044 = vmor %vm436, %vm788
        %vm1045 = vmor %vm437, %vm789
        %vm1046 = vmor %vm438, %vm790
        %vm1047 = vmor %vm439, %vm791
        %vm1048 = vmor %vm440, %vm792
        %vm1049 = vmor %vm441, %vm793
        %vm1050 = vmor %vm442, %vm794
        %vm1051 = vmor %vm443, %vm795
        %vm1052 = vmor %vm444, %vm796
        %vm1053 = vmor %vm445, %vm797
        %vm1054 = vmor %vm446, %vm798
        %vm1055 = vmor %vm447, %vm799
        %vm1056 = vmor %vm448, %vm800
        %vm1057 = vmor %vm449, %vm801
        %vm1058 = vmor %vm450, %vm802
        %vm1059 = vmor %vm451, %vm803
        %vm1060 = vmor %vm452, %vm804
        %vm1061 = vmor %vm453, %vm805
        %vm1062 = vmor %vm454, %vm806
        %vm1063 = vmor %vm455, %vm807
        %vm1064 = vmor %vm456, %vm808
        %vm1065 = vmor %vm457, %vm809
        %vm1066 = vmor %vm458, %vm810
        %vm1067 = vmor %vm459, %vm811
        %vm1068 = vmor %vm460, %vm812
        %vm1069 = vmor %vm461, %vm813
        %vm1070 = vmor %vm462, %vm814
        %vm1071 = vmor %vm463, %vm815
        %vm1072 = vmor %vm464, %vm816
        %vm1073 = vmor %vm465, %vm817
        %vm1074 = vmor %vm466, %vm818
        %vm1075 = vmor %vm467, %vm819
        %vm1076 = vmor %vm468, %vm820
        %vm1077 = vmor %vm469, %vm821
        %vm1078 = vmor %vm470, %vm822
        %vm1079 = vmor %vm471, %vm823
        %vm1080 = vmor %vm472, %vm824
        %vm1081 = vmor %vm473, %vm825
        %vm1082 = vmor %vm474, %vm826
        %vm1083 = vmor %vm475, %vm827
        %vm1084 = vmor %vm476, %vm828
        %vm1085 = vmor %vm477, %vm829
        %vm1086 = vmor %vm478, %vm830
        %vm1087 = vmor %vm479, %vm831
        %vm1088 = vmor %vm480, %vm832
        %vm1089 = vmor %vm481, %vm833
        %vm1090 = vmor %vm482, %vm834
        %vm1091 = vmor %vm483, %vm835
        %vm1092 = vmor %vm484, %vm836
        %vm1093 = vmor %vm485, %vm837
        %vm1094 = vmor %vm486, %vm838
        %vm1095 = vmor %vm487, %vm839
        %vm1096 = vmor %vm488, %vm840
        %vm1097 = vmor %vm489, %vm841
        %vm1098 = vmor %vm490, %vm842
        %vm1099 = vmor %vm491, %vm843
        %vm1100 = vmor %vm492, %vm844
        %vm1101 = vmor %vm493, %vm845
        %vm1102 = vmor %vm494, %vm846
        %vm1103 = vmor %vm495, %vm847
        %vm1104 = vmor %vm496, %vm848
        %vm1105 = vmor %vm497, %vm849
        %vm1106 = vmor %vm498, %vm850
        %vm1107 = vmor %vm499, %vm851
        %vm1108 = vmor %vm500, %vm852
        %vm1109 = vmor %vm501, %vm853
        %vm1110 = vmor %vm502, %vm854
        %vm1111 = vmor %vm503, %vm855
        %vm1112 = vmor %vm504, %vm856
        %vm1113 = vmor %vm505, %vm857
        %vm1114 = vmor %vm506, %vm858
        %vm1115 = vmor %vm507, %vm859
        %vm1116 = vmor %vm508, %vm860
        %vm1117 = vmor %vm509, %vm861
        %vm1118 = vmor %vm510, %vm862
        %vm1119 = vmor %vm511, %vm863
        %vm1120 = vmor %vm512, %vm864
        %vm1121 = vmor %vm513, %vm865
        %vm1122 = vmor %vm514, %vm866
        %vm1123 = vmor %vm515, %vm867
        %vm1124 = vmor %vm516, %vm868
        %vm1125 = vmor %vm517, %vm869
        %vm1126 = vmor %vm518, %vm870
        %vm1127 = vmor %vm519, %vm871
        %vm1128 = vmor %vm520, %vm872
        %vm1129 = vmor %vm521, %vm873
        %vm1130 = vmor %vm522, %vm874
        %vm1131 = vmor %vm523, %vm875
        %vm1132 = vmor %vm524, %vm876
        %vm1133 = vmor %vm525, %vm877
        %vm1134 = vmor %vm526, %vm878
        %vm1135 = vmor %vm527, %vm879
        %vm1136 = vmor %vm528, %vm880
        %vm1137 = vmor %vm529, %vm881
        %vm1138 = vmor %vm530, %vm882
        %vm1139 = vmor %vm531, %vm883
        %vm1140 = vmor %vm532, %vm884
        %vm1141 = vmor %vm533, %vm885
        %vm1142 = vmor %vm534, %vm886
        %vm1143 = vmor %vm535, %vm887
        %vm1144 = vmor %vm536, %vm888
        %vm1145 = vmor %vm537, %vm889
        %vm1146 = vmor %vm538, %vm890
        %vm1147 = vmor %vm539, %vm891
        %vm1148 = vmor %vm540, %vm892
        %vm1149 = vmor %vm541, %vm893
        %vm1150 = vmor %vm542, %vm894
        %vm1151 = vmor %vm543, %vm895
        %vm1152 = vmor %vm544, %vm896
        %vm1153 = vmor %vm545, %vm897
        %vm1154 = vmor %vm546, %vm898
        %vm1155 = vmor %vm547, %vm899
        %vm1156 = vmor %vm548, %vm900
        %vm1157 = vmor %vm549, %vm901
        %vm1158 = vmor %vm550, %vm902
        %vm1159 = vmor %vm551, %vm903
        %vm1160 = vmor %vm552, %vm904
        %vm1161 = vmor %vm553, %vm905
        %vm1162 = vmor %vm554, %vm906
        %vm1163 = vmor %vm555, %vm907
        %vm1164 = vmor %vm556, %vm908
        %vm1165 = vmor %vm557, %vm909
        %vm1166 = vmor %vm558, %vm910
        %vm1167 = vmor %vm559, %vm911
        %vm1168 = vmor %vm560, %vm912
        %vm1169 = vmor %vm561, %vm913
        %vm1170 = vmor %vm562, %vm914
        %vm1171 = vmor %vm563, %vm915
        %vm1172 = vmor %vm564, %vm916
        %vm1173 = vmor %vm565, %vm917
        %vm1174 = vmor %vm566, %vm918
        %vm1175 = vmor %vm567, %vm919
        %vm1176 = vmor %vm568, %vm920
        %vm1177 = vmor %vm569, %vm921
        %vm1178 = vmor %vm570, %vm922
        %vm1179 = vmor %vm571, %vm923
        %vm1180 = vmor %vm572, %vm924
        %vm1181 = vmor %vm573, %vm925
        %vm1182 = vmor %vm574, %vm926
        %vm1183 = vmor %vm575, %vm927
        %vm1184 = vmor %vm576, %vm928
        %vm1185 = vmor %vm577, %vm929
        %vm1186 = vmor %vm578, %vm930
        %vm1187 = vmor %vm579, %vm931
        %vm1188 = vmor %vm580, %vm932
        %vm1189 = vmor %vm581, %vm933
        %vm1190 = vmor %vm582, %vm934
        %vm1191 = vmor %vm583, %vm935
        %vm1192 = vmor %vm584, %vm936
        %vm1193 = vmor %vm585, %vm937
        %vm1194 = vmor %vm586, %vm938
        %vm1195 = vmor %vm587, %vm939
        %vm1196 = vmor %vm588, %vm940
        %vm1197 = vmor %vm589, %vm941
        %vm1198 = vmor %vm590, %vm942
        %vm1199 = vmor %vm591, %vm943
        %vm1200 = vmor %vm592, %vm944
        %vm1201 = vmor %vm593, %vm945
        %vm1202 = vmor %vm594, %vm946
        %vm1203 = vmor %vm595, %vm947
        %vm1204 = vmor %vm596, %vm948
        %vm1205 = vmor %vm597, %vm949
        %vm1206 = vmor %vm598, %vm950
        %vm1207 = vmor %vm599, %vm951
        %vm1208 = vmor %vm600, %vm952
        %vm1209 = vmor %vm601, %vm953
        %vm1210 = vmor %vm602, %vm954
        %vm1211 = vmor %vm603, %vm955
        %v1212 = vsel %vm956, 1, 0
        %v1213 = vsel %vm957, 1, 0
        %v1214 = vsel %vm958, 1, 0
        %v1215 = vsel %vm959, 1, 0
        %v1216 = vsel %vm960, 1, 0
        %v1217 = vsel %vm961, 1, 0
        %v1218 = vsel %vm962, 1, 0
        %v1219 = vsel %vm963, 1, 0
        %v1220 = vsel %vm964, 1, 0
        %v1221 = vsel %vm965, 1, 0
        %v1222 = vsel %vm966, 1, 0
        %v1223 = vsel %vm967, 1, 0
        %v1224 = vsel %vm968, 1, 0
        %v1225 = vsel %vm969, 1, 0
        %v1226 = vsel %vm970, 1, 0
        %v1227 = vsel %vm971, 1, 0
        %v1228 = vsel %vm972, 1, 0
        %v1229 = vsel %vm973, 1, 0
        %v1230 = vsel %vm974, 1, 0
        %v1231 = vsel %vm975, 1, 0
        %v1232 = vsel %vm976, 1, 0
        %v1233 = vsel %vm977, 1, 0
        %v1234 = vsel %vm978, 1, 0
        %v1235 = vsel %vm979, 1, 0
        %v1236 = vsel %vm980, 1, 0
        %v1237 = vsel %vm981, 1, 0
        %v1238 = vsel %vm982, 1, 0
        %v1239 = vsel %vm983, 1, 0
        %v1240 = vsel %vm984, 1, 0
        %v1241 = vsel %vm985, 1, 0
        %v1242 = vsel %vm986, 1, 0
        %v1243 = vsel %vm987, 1, 0
        %v1244 = vsel %vm988, 1, 0
        %v1245 = vsel %vm989, 1, 0
        %v1246 = vsel %vm990, 1, 0
        %v1247 = vsel %vm991, 1, 0
        %v1248 = vsel %vm992, 1, 0
        %v1249 = vsel %vm993, 1, 0
        %v1250 = vsel %vm994, 1, 0
        %v1251 = vsel %vm995, 1, 0
        %v1252 = vsel %vm996, 1, 0
        %v1253 = vsel %vm997, 1, 0
        %v1254 = vsel %vm998, 1, 0
        %v1255 = vsel %vm999, 1, 0
        %v1256 = vsel %vm1000, 1, 0
        %v1257 = vsel %vm1001, 1, 0
        %v1258 = vsel %vm1002, 1, 0
        %v1259 = vsel %vm1003, 1, 0
        %v1260 = vsel %vm1004, 1, 0
        %v1261 = vsel %vm1005, 1, 0
        %v1262 = vsel %vm1006, 1, 0
        %v1263 = vsel %vm1007, 1, 0
        %v1264 = vsel %vm1008, 1, 0
        %v1265 = vsel %vm1009, 1, 0
        %v1266 = vsel %vm1010, 1, 0
        %v1267 = vsel %vm1011, 1, 0
        %v1268 = vsel %vm1012, 1, 0
        %v1269 = vsel %vm1013, 1, 0
        %v1270 = vsel %vm1014, 1, 0
        %v1271 = vsel %vm1015, 1, 0
        %v1272 = vsel %vm1016, 1, 0
        %v1273 = vsel %vm1017, 1, 0
        %v1274 = vsel %vm1018, 1, 0
        %v1275 = vsel %vm1019, 1, 0
        %v1276 = vsel %vm1020, 1, 0
        %v1277 = vsel %vm1021, 1, 0
        %v1278 = vsel %vm1022, 1, 0
        %v1279 = vsel %vm1023, 1, 0
        %v1280 = vsel %vm1024, 1, 0
        %v1281 = vsel %vm1025, 1, 0
        %v1282 = vsel %vm1026, 1, 0
        %v1283 = vsel %vm1027, 1, 0
        %v1284 = vsel %vm1028, 1, 0
        %v1285 = vsel %vm1029, 1, 0
        %v1286 = vsel %vm1030, 1, 0
        %v1287 = vsel %vm1031, 1, 0
        %v1288 = vsel %vm1032, 1, 0
        %v1289 = vsel %vm1033, 1, 0
        %v1290 = vsel %vm1034, 1, 0
        %v1291 = vsel %vm1035, 1, 0
        %v1292 = vsel %vm1036, 1, 0
        %v1293 = vsel %vm1037, 1, 0
        %v1294 = vsel %vm1038, 1, 0
        %v1295 = vsel %vm1039, 1, 0
        %v1296 = vsel %vm1040, 1, 0
        %v1297 = vsel %vm1041, 1, 0
        %v1298 = vsel %vm1042, 1, 0
        %v1299 = vsel %vm1043, 1, 0
        %v1300 = vsel %vm1044, 1, 0
        %v1301 = vsel %vm1045, 1, 0
        %v1302 = vsel %vm1046, 1, 0
        %v1303 = vsel %vm1047, 1, 0
        %v1304 = vsel %vm1048, 1, 0
        %v1305 = vsel %vm1049, 1, 0
        %v1306 = vsel %vm1050, 1, 0
        %v1307 = vsel %vm1051, 1, 0
        %v1308 = vsel %vm1052, 1, 0
        %v1309 = vsel %vm1053, 1, 0
        %v1310 = vsel %vm1054, 1, 0
        %v1311 = vsel %vm1055, 1, 0
        %v1312 = vsel %vm1056, 1, 0
        %v1313 = vsel %vm1057, 1, 0
        %v1314 = vsel %vm1058, 1, 0
        %v1315 = vsel %vm1059, 1, 0
        %v1316 = vsel %vm1060, 1, 0
        %v1317 = vsel %vm1061, 1, 0
        %v1318 = vsel %vm1062, 1, 0
        %v1319 = vsel %vm1063, 1, 0
        %v1320 = vsel %vm1064, 1, 0
        %v1321 = vsel %vm1065, 1, 0
        %v1322 = vsel %vm1066, 1, 0
        %v1323 = vsel %vm1067, 1, 0
        %v1324 = vsel %vm1068, 1, 0
        %v1325 = vsel %vm1069, 1, 0
        %v1326 = vsel %vm1070, 1, 0
        %v1327 = vsel %vm1071, 1, 0
        %v1328 = vsel %vm1072, 1, 0
        %v1329 = vsel %vm1073, 1, 0
        %v1330 = vsel %vm1074, 1, 0
        %v1331 = vsel %vm1075, 1, 0
        %v1332 = vsel %vm1076, 1, 0
        %v1333 = vsel %vm1077, 1, 0
        %v1334 = vsel %vm1078, 1, 0
        %v1335 = vsel %vm1079, 1, 0
        %v1336 = vsel %vm1080, 1, 0
        %v1337 = vsel %vm1081, 1, 0
        %v1338 = vsel %vm1082, 1, 0
        %v1339 = vsel %vm1083, 1, 0
        %v1340 = vsel %vm1084, 1, 0
        %v1341 = vsel %vm1085, 1, 0
        %v1342 = vsel %vm1086, 1, 0
        %v1343 = vsel %vm1087, 1, 0
        %v1344 = vsel %vm1088, 1, 0
        %v1345 = vsel %vm1089, 1, 0
        %v1346 = vsel %vm1090, 1, 0
        %v1347 = vsel %vm1091, 1, 0
        %v1348 = vsel %vm1092, 1, 0
        %v1349 = vsel %vm1093, 1, 0
        %v1350 = vsel %vm1094, 1, 0
        %v1351 = vsel %vm1095, 1, 0
        %v1352 = vsel %vm1096, 1, 0
        %v1353 = vsel %vm1097, 1, 0
        %v1354 = vsel %vm1098, 1, 0
        %v1355 = vsel %vm1099, 1, 0
        %v1356 = vsel %vm1100, 1, 0
        %v1357 = vsel %vm1101, 1, 0
        %v1358 = vsel %vm1102, 1, 0
        %v1359 = vsel %vm1103, 1, 0
        %v1360 = vsel %vm1104, 1, 0
        %v1361 = vsel %vm1105, 1, 0
        %v1362 = vsel %vm1106, 1, 0
        %v1363 = vsel %vm1107, 1, 0
        %v1364 = vsel %vm1108, 1, 0
        %v1365 = vsel %vm1109, 1, 0
        %v1366 = vsel %vm1110, 1, 0
        %v1367 = vsel %vm1111, 1, 0
        %v1368 = vsel %vm1112, 1, 0
        %v1369 = vsel %vm1113, 1, 0
        %v1370 = vsel %vm1114, 1, 0
        %v1371 = vsel %vm1115, 1, 0
        %v1372 = vsel %vm1116, 1, 0
        %v1373 = vsel %vm1117, 1, 0
        %v1374 = vsel %vm1118, 1, 0
        %v1375 = vsel %vm1119, 1, 0
        %v1376 = vsel %vm1120, 1, 0
        %v1377 = vsel %vm1121, 1, 0
        %v1378 = vsel %vm1122, 1, 0
        %v1379 = vsel %vm1123, 1, 0
        %v1380 = vsel %vm1124, 1, 0
        %v1381 = vsel %vm1125, 1, 0
        %v1382 = vsel %vm1126, 1, 0
        %v1383 = vsel %vm1127, 1, 0
        %v1384 = vsel %vm1128, 1, 0
        %v1385 = vsel %vm1129, 1, 0
        %v1386 = vsel %vm1130, 1, 0
        %v1387 = vsel %vm1131, 1, 0
        %v1388 = vsel %vm1132, 1, 0
        %v1389 = vsel %vm1133, 1, 0
        %v1390 = vsel %vm1134, 1, 0
        %v1391 = vsel %vm1135, 1, 0
        %v1392 = vsel %vm1136, 1, 0
        %v1393 = vsel %vm1137, 1, 0
        %v1394 = vsel %vm1138, 1, 0
        %v1395 = vsel %vm1139, 1, 0
        %v1396 = vsel %vm1140, 1, 0
        %v1397 = vsel %vm1141, 1, 0
        %v1398 = vsel %vm1142, 1, 0
        %v1399 = vsel %vm1143, 1, 0
        %v1400 = vsel %vm1144, 1, 0
        %v1401 = vsel %vm1145, 1, 0
        %v1402 = vsel %vm1146, 1, 0
        %v1403 = vsel %vm1147, 1, 0
        %v1404 = vsel %vm1148, 1, 0
        %v1405 = vsel %vm1149, 1, 0
        %v1406 = vsel %vm1150, 1, 0
        %v1407 = vsel %vm1151, 1, 0
        %v1408 = vsel %vm1152, 1, 0
        %v1409 = vsel %vm1153, 1, 0
        %v1410 = vsel %vm1154, 1, 0
        %v1411 = vsel %vm1155, 1, 0
        %v1412 = vsel %vm1156, 1, 0
        %v1413 = vsel %vm1157, 1, 0
        %v1414 = vsel %vm1158, 1, 0
        %v1415 = vsel %vm1159, 1, 0
        %v1416 = vsel %vm1160, 1, 0
        %v1417 = vsel %vm1161, 1, 0
        %v1418 = vsel %vm1162, 1, 0
        %v1419 = vsel %vm1163, 1, 0
        %v1420 = vsel %vm1164, 1, 0
        %v1421 = vsel %vm1165, 1, 0
        %v1422 = vsel %vm1166, 1, 0
        %v1423 = vsel %vm1167, 1, 0
        %v1424 = vsel %vm1168, 1, 0
        %v1425 = vsel %vm1169, 1, 0
        %v1426 = vsel %vm1170, 1, 0
        %v1427 = vsel %vm1171, 1, 0
        %v1428 = vsel %vm1172, 1, 0
        %v1429 = vsel %vm1173, 1, 0
        %v1430 = vsel %vm1174, 1, 0
        %v1431 = vsel %vm1175, 1, 0
        %v1432 = vsel %vm1176, 1, 0
        %v1433 = vsel %vm1177, 1, 0
        %v1434 = vsel %vm1178, 1, 0
        %v1435 = vsel %vm1179, 1, 0
        %v1436 = vsel %vm1180, 1, 0
        %v1437 = vsel %vm1181, 1, 0
        %v1438 = vsel %vm1182, 1, 0
        %v1439 = vsel %vm1183, 1, 0
        %v1440 = vsel %vm1184, 1, 0
        %v1441 = vsel %vm1185, 1, 0
        %v1442 = vsel %vm1186, 1, 0
        %v1443 = vsel %vm1187, 1, 0
        %v1444 = vsel %vm1188, 1, 0
        %v1445 = vsel %vm1189, 1, 0
        %v1446 = vsel %vm1190, 1, 0
        %v1447 = vsel %vm1191, 1, 0
        %v1448 = vsel %vm1192, 1, 0
        %v1449 = vsel %vm1193, 1, 0
        %v1450 = vsel %vm1194, 1, 0
        %v1451 = vsel %vm1195, 1, 0
        %v1452 = vsel %vm1196, 1, 0
        %v1453 = vsel %vm1197, 1, 0
        %v1454 = vsel %vm1198, 1, 0
        %v1455 = vsel %vm1199, 1, 0
        %v1456 = vsel %vm1200, 1, 0
        %v1457 = vsel %vm1201, 1, 0
        %v1458 = vsel %vm1202, 1, 0
        %v1459 = vsel %vm1203, 1, 0
        %v1460 = vsel %vm1204, 1, 0
        %v1461 = vsel %vm1205, 1, 0
        %v1462 = vsel %vm1206, 1, 0
        %v1463 = vsel %vm1207, 1, 0
        %v1464 = vsel %vm1208, 1, 0
        %v1465 = vsel %vm1209, 1, 0
        %v1466 = vsel %vm1210, 1, 0
        %v1467 = vsel %vm1211, 1, 0
        %v1468 = vcvt.s32.f32 %v1212
        %v1469 = vcvt.s32.f32 %v1213
        %v1470 = vcvt.s32.f32 %v1214
        %v1471 = vcvt.s32.f32 %v1215
        %v1472 = vcvt.s32.f32 %v1216
        %v1473 = vcvt.s32.f32 %v1217
        %v1474 = vcvt.s32.f32 %v1218
        %v1475 = vcvt.s32.f32 %v1219
        %v1476 = vcvt.s32.f32 %v1220
        %v1477 = vcvt.s32.f32 %v1221
        %v1478 = vcvt.s32.f32 %v1222
        %v1479 = vcvt.s32.f32 %v1223
        %v1480 = vcvt.s32.f32 %v1224
        %v1481 = vcvt.s32.f32 %v1225
        %v1482 = vcvt.s32.f32 %v1226
        %v1483 = vcvt.s32.f32 %v1227
        %v1484 = vcvt.s32.f32 %v1228
        %v1485 = vcvt.s32.f32 %v1229
        %v1486 = vcvt.s32.f32 %v1230
        %v1487 = vcvt.s32.f32 %v1231
        %v1488 = vcvt.s32.f32 %v1232
        %v1489 = vcvt.s32.f32 %v1233
        %v1490 = vcvt.s32.f32 %v1234
        %v1491 = vcvt.s32.f32 %v1235
        %v1492 = vcvt.s32.f32 %v1236
        %v1493 = vcvt.s32.f32 %v1237
        %v1494 = vcvt.s32.f32 %v1238
        %v1495 = vcvt.s32.f32 %v1239
        %v1496 = vcvt.s32.f32 %v1240
        %v1497 = vcvt.s32.f32 %v1241
        %v1498 = vcvt.s32.f32 %v1242
        %v1499 = vcvt.s32.f32 %v1243
        %v1500 = vcvt.s32.f32 %v1244
        %v1501 = vcvt.s32.f32 %v1245
        %v1502 = vcvt.s32.f32 %v1246
        %v1503 = vcvt.s32.f32 %v1247
        %v1504 = vcvt.s32.f32 %v1248
        %v1505 = vcvt.s32.f32 %v1249
        %v1506 = vcvt.s32.f32 %v1250
        %v1507 = vcvt.s32.f32 %v1251
        %v1508 = vcvt.s32.f32 %v1252
        %v1509 = vcvt.s32.f32 %v1253
        %v1510 = vcvt.s32.f32 %v1254
        %v1511 = vcvt.s32.f32 %v1255
        %v1512 = vcvt.s32.f32 %v1256
        %v1513 = vcvt.s32.f32 %v1257
        %v1514 = vcvt.s32.f32 %v1258
        %v1515 = vcvt.s32.f32 %v1259
        %v1516 = vcvt.s32.f32 %v1260
        %v1517 = vcvt.s32.f32 %v1261
        %v1518 = vcvt.s32.f32 %v1262
        %v1519 = vcvt.s32.f32 %v1263
        %v1520 = vcvt.s32.f32 %v1264
        %v1521 = vcvt.s32.f32 %v1265
        %v1522 = vcvt.s32.f32 %v1266
        %v1523 = vcvt.s32.f32 %v1267
        %v1524 = vcvt.s32.f32 %v1268
        %v1525 = vcvt.s32.f32 %v1269
        %v1526 = vcvt.s32.f32 %v1270
        %v1527 = vcvt.s32.f32 %v1271
        %v1528 = vcvt.s32.f32 %v1272
        %v1529 = vcvt.s32.f32 %v1273
        %v1530 = vcvt.s32.f32 %v1274
        %v1531 = vcvt.s32.f32 %v1275
        %v1532 = vcvt.s32.f32 %v1276
        %v1533 = vcvt.s32.f32 %v1277
        %v1534 = vcvt.s32.f32 %v1278
        %v1535 = vcvt.s32.f32 %v1279
        %v1536 = vcvt.s32.f32 %v1280
        %v1537 = vcvt.s32.f32 %v1281
        %v1538 = vcvt.s32.f32 %v1282
        %v1539 = vcvt.s32.f32 %v1283
        %v1540 = vcvt.s32.f32 %v1284
        %v1541 = vcvt.s32.f32 %v1285
        %v1542 = vcvt.s32.f32 %v1286
        %v1543 = vcvt.s32.f32 %v1287
        %v1544 = vcvt.s32.f32 %v1288
        %v1545 = vcvt.s32.f32 %v1289
        %v1546 = vcvt.s32.f32 %v1290
        %v1547 = vcvt.s32.f32 %v1291
        %v1548 = vcvt.s32.f32 %v1292
        %v1549 = vcvt.s32.f32 %v1293
        %v1550 = vcvt.s32.f32 %v1294
        %v1551 = vcvt.s32.f32 %v1295
        %v1552 = vcvt.s32.f32 %v1296
        %v1553 = vcvt.s32.f32 %v1297
        %v1554 = vcvt.s32.f32 %v1298
        %v1555 = vcvt.s32.f32 %v1299
        %v1556 = vcvt.s32.f32 %v1300
        %v1557 = vcvt.s32.f32 %v1301
        %v1558 = vcvt.s32.f32 %v1302
        %v1559 = vcvt.s32.f32 %v1303
        %v1560 = vcvt.s32.f32 %v1304
        %v1561 = vcvt.s32.f32 %v1305
        %v1562 = vcvt.s32.f32 %v1306
        %v1563 = vcvt.s32.f32 %v1307
        %v1564 = vcvt.s32.f32 %v1308
        %v1565 = vcvt.s32.f32 %v1309
        %v1566 = vcvt.s32.f32 %v1310
        %v1567 = vcvt.s32.f32 %v1311
        %v1568 = vcvt.s32.f32 %v1312
        %v1569 = vcvt.s32.f32 %v1313
        %v1570 = vcvt.s32.f32 %v1314
        %v1571 = vcvt.s32.f32 %v1315
        %v1572 = vcvt.s32.f32 %v1316
        %v1573 = vcvt.s32.f32 %v1317
        %v1574 = vcvt.s32.f32 %v1318
        %v1575 = vcvt.s32.f32 %v1319
        %v1576 = vcvt.s32.f32 %v1320
        %v1577 = vcvt.s32.f32 %v1321
        %v1578 = vcvt.s32.f32 %v1322
        %v1579 = vcvt.s32.f32 %v1323
        %v1580 = vcvt.s32.f32 %v1324
        %v1581 = vcvt.s32.f32 %v1325
        %v1582 = vcvt.s32.f32 %v1326
        %v1583 = vcvt.s32.f32 %v1327
        %v1584 = vcvt.s32.f32 %v1328
        %v1585 = vcvt.s32.f32 %v1329
        %v1586 = vcvt.s32.f32 %v1330
        %v1587 = vcvt.s32.f32 %v1331
        %v1588 = vcvt.s32.f32 %v1332
        %v1589 = vcvt.s32.f32 %v1333
        %v1590 = vcvt.s32.f32 %v1334
        %v1591 = vcvt.s32.f32 %v1335
        %v1592 = vcvt.s32.f32 %v1336
        %v1593 = vcvt.s32.f32 %v1337
        %v1594 = vcvt.s32.f32 %v1338
        %v1595 = vcvt.s32.f32 %v1339
        %v1596 = vcvt.s32.f32 %v1340
        %v1597 = vcvt.s32.f32 %v1341
        %v1598 = vcvt.s32.f32 %v1342
        %v1599 = vcvt.s32.f32 %v1343
        %v1600 = vcvt.s32.f32 %v1344
        %v1601 = vcvt.s32.f32 %v1345
        %v1602 = vcvt.s32.f32 %v1346
        %v1603 = vcvt.s32.f32 %v1347
        %v1604 = vcvt.s32.f32 %v1348
        %v1605 = vcvt.s32.f32 %v1349
        %v1606 = vcvt.s32.f32 %v1350
        %v1607 = vcvt.s32.f32 %v1351
        %v1608 = vcvt.s32.f32 %v1352
        %v1609 = vcvt.s32.f32 %v1353
        %v1610 = vcvt.s32.f32 %v1354
        %v1611 = vcvt.s32.f32 %v1355
        %v1612 = vcvt.s32.f32 %v1356
        %v1613 = vcvt.s32.f32 %v1357
        %v1614 = vcvt.s32.f32 %v1358
        %v1615 = vcvt.s32.f32 %v1359
        %v1616 = vcvt.s32.f32 %v1360
        %v1617 = vcvt.s32.f32 %v1361
        %v1618 = vcvt.s32.f32 %v1362
        %v1619 = vcvt.s32.f32 %v1363
        %v1620 = vcvt.s32.f32 %v1364
        %v1621 = vcvt.s32.f32 %v1365
        %v1622 = vcvt.s32.f32 %v1366
        %v1623 = vcvt.s32.f32 %v1367
        %v1624 = vcvt.s32.f32 %v1368
        %v1625 = vcvt.s32.f32 %v1369
        %v1626 = vcvt.s32.f32 %v1370
        %v1627 = vcvt.s32.f32 %v1371
        %v1628 = vcvt.s32.f32 %v1372
        %v1629 = vcvt.s32.f32 %v1373
        %v1630 = vcvt.s32.f32 %v1374
        %v1631 = vcvt.s32.f32 %v1375
        %v1632 = vcvt.s32.f32 %v1376
        %v1633 = vcvt.s32.f32 %v1377
        %v1634 = vcvt.s32.f32 %v1378
        %v1635 = vcvt.s32.f32 %v1379
        %v1636 = vcvt.s32.f32 %v1380
        %v1637 = vcvt.s32.f32 %v1381
        %v1638 = vcvt.s32.f32 %v1382
        %v1639 = vcvt.s32.f32 %v1383
        %v1640 = vcvt.s32.f32 %v1384
        %v1641 = vcvt.s32.f32 %v1385
        %v1642 = vcvt.s32.f32 %v1386
        %v1643 = vcvt.s32.f32 %v1387
        %v1644 = vcvt.s32.f32 %v1388
        %v1645 = vcvt.s32.f32 %v1389
        %v1646 = vcvt.s32.f32 %v1390
        %v1647 = vcvt.s32.f32 %v1391
        %v1648 = vcvt.s32.f32 %v1392
        %v1649 = vcvt.s32.f32 %v1393
        %v1650 = vcvt.s32.f32 %v1394
        %v1651 = vcvt.s32.f32 %v1395
        %v1652 = vcvt.s32.f32 %v1396
        %v1653 = vcvt.s32.f32 %v1397
        %v1654 = vcvt.s32.f32 %v1398
        %v1655 = vcvt.s32.f32 %v1399
        %v1656 = vcvt.s32.f32 %v1400
        %v1657 = vcvt.s32.f32 %v1401
        %v1658 = vcvt.s32.f32 %v1402
        %v1659 = vcvt.s32.f32 %v1403
        %v1660 = vcvt.s32.f32 %v1404
        %v1661 = vcvt.s32.f32 %v1405
        %v1662 = vcvt.s32.f32 %v1406
        %v1663 = vcvt.s32.f32 %v1407
        %v1664 = vcvt.s32.f32 %v1408
        %v1665 = vcvt.s32.f32 %v1409
        %v1666 = vcvt.s32.f32 %v1410
        %v1667 = vcvt.s32.f32 %v1411
        %v1668 = vcvt.s32.f32 %v1412
        %v1669 = vcvt.s32.f32 %v1413
        %v1670 = vcvt.s32.f32 %v1414
        %v1671 = vcvt.s32.f32 %v1415
        %v1672 = vcvt.s32.f32 %v1416
        %v1673 = vcvt.s32.f32 %v1417
        %v1674 = vcvt.s32.f32 %v1418
        %v1675 = vcvt.s32.f32 %v1419
        %v1676 = vcvt.s32.f32 %v1420
        %v1677 = vcvt.s32.f32 %v1421
        %v1678 = vcvt.s32.f32 %v1422
        %v1679 = vcvt.s32.f32 %v1423
        %v1680 = vcvt.s32.f32 %v1424
        %v1681 = vcvt.s32.f32 %v1425
        %v1682 = vcvt.s32.f32 %v1426
        %v1683 = vcvt.s32.f32 %v1427
        %v1684 = vcvt.s32.f32 %v1428
        %v1685 = vcvt.s32.f32 %v1429
        %v1686 = vcvt.s32.f32 %v1430
        %v1687 = vcvt.s32.f32 %v1431
        %v1688 = vcvt.s32.f32 %v1432
        %v1689 = vcvt.s32.f32 %v1433
        %v1690 = vcvt.s32.f32 %v1434
        %v1691 = vcvt.s32.f32 %v1435
        %v1692 = vcvt.s32.f32 %v1436
        %v1693 = vcvt.s32.f32 %v1437
        %v1694 = vcvt.s32.f32 %v1438
        %v1695 = vcvt.s32.f32 %v1439
        %v1696 = vcvt.s32.f32 %v1440
        %v1697 = vcvt.s32.f32 %v1441
        %v1698 = vcvt.s32.f32 %v1442
        %v1699 = vcvt.s32.f32 %v1443
        %v1700 = vcvt.s32.f32 %v1444
        %v1701 = vcvt.s32.f32 %v1445
        %v1702 = vcvt.s32.f32 %v1446
        %v1703 = vcvt.s32.f32 %v1447
        %v1704 = vcvt.s32.f32 %v1448
        %v1705 = vcvt.s32.f32 %v1449
        %v1706 = vcvt.s32.f32 %v1450
        %v1707 = vcvt.s32.f32 %v1451
        %v1708 = vcvt.s32.f32 %v1452
        %v1709 = vcvt.s32.f32 %v1453
        %v1710 = vcvt.s32.f32 %v1454
        %v1711 = vcvt.s32.f32 %v1455
        %v1712 = vcvt.s32.f32 %v1456
        %v1713 = vcvt.s32.f32 %v1457
        %v1714 = vcvt.s32.f32 %v1458
        %v1715 = vcvt.s32.f32 %v1459
        %v1716 = vcvt.s32.f32 %v1460
        %v1717 = vcvt.s32.f32 %v1461
        %v1718 = vcvt.s32.f32 %v1462
        %v1719 = vcvt.s32.f32 %v1463
        %v1720 = vcvt.s32.f32 %v1464
        %v1721 = vcvt.s32.f32 %v1465
        %v1722 = vcvt.s32.f32 %v1466
        %v1723 = vcvt.s32.f32 %v1467
        %v1724 = vld [vmem:[#allocation2] sm:$0xff]
        %v1725 = vld [vmem:[#allocation2 + $0x8] sm:$0xff]
        %v1726 = vld [vmem:[#allocation2 + $0x10] sm:$0xff]
        %v1727 = vld [vmem:[#allocation2 + $0x18] sm:$0xff]
        %v1728 = vld [vmem:[#allocation2 + $0x20] sm:$0xff]
        %v1729 = vld [vmem:[#allocation2 + $0x28] sm:$0xff]
        %v1730 = vld [vmem:[#allocation2 + $0x30] sm:$0xff]
        %v1731 = vld [vmem:[#allocation2 + $0x38] sm:$0xff]
        %v1732 = vld [vmem:[#allocation2 + $0x40] sm:$0xff]
        %v1733 = vld [vmem:[#allocation2 + $0x48] sm:$0xff]
        %v1734 = vld [vmem:[#allocation2 + $0x50] sm:$0xff]
        %v1735 = vld [vmem:[#allocation2 + $0x58] sm:$0xff]
        %v1736 = vld [vmem:[#allocation2 + $0x60] sm:$0xff]
        %v1737 = vld [vmem:[#allocation2 + $0x68] sm:$0xff]
        %v1738 = vld [vmem:[#allocation2 + $0x70] sm:$0xff]
        %v1739 = vld [vmem:[#allocation2 + $0x78] sm:$0xff]
        %v1740 = vld [vmem:[#allocation2 + $0x80] sm:$0xff]
        %v1741 = vld [vmem:[#allocation2 + $0x88] sm:$0xff]
        %v1742 = vld [vmem:[#allocation2 + $0x90] sm:$0xff]
        %v1743 = vld [vmem:[#allocation2 + $0x98] sm:$0xff]
        %v1744 = vld [vmem:[#allocation2 + $0xa0] sm:$0xff]
        %v1745 = vld [vmem:[#allocation2 + $0xa8] sm:$0xff]
        %v1746 = vld [vmem:[#allocation2 + $0xb0] sm:$0xff]
        %v1747 = vld [vmem:[#allocation2 + $0xb8] sm:$0xff]
        %v1748 = vld [vmem:[#allocation2 + $0xc0] sm:$0xff]
        %v1749 = vld [vmem:[#allocation2 + $0xc8] sm:$0xff]
        %v1750 = vld [vmem:[#allocation2 + $0xd0] sm:$0xff]
        %v1751 = vld [vmem:[#allocation2 + $0xd8] sm:$0xff]
        %v1752 = vld [vmem:[#allocation2 + $0xe0] sm:$0xff]
        %v1753 = vld [vmem:[#allocation2 + $0xe8] sm:$0xff]
        %v1754 = vld [vmem:[#allocation2 + $0xf0] sm:$0xff]
        %v1755 = vld [vmem:[#allocation2 + $0xf8] sm:$0xff]
        %v1756 = vld [vmem:[#allocation2 + $0x100] sm:$0xff]
        %v1757 = vld [vmem:[#allocation2 + $0x108] sm:$0xff]
        %v1758 = vld [vmem:[#allocation2 + $0x110] sm:$0xff]
        %v1759 = vld [vmem:[#allocation2 + $0x118] sm:$0xff]
        %v1760 = vld [vmem:[#allocation2 + $0x120] sm:$0xff]
        %v1761 = vld [vmem:[#allocation2 + $0x128] sm:$0xff]
        %v1762 = vld [vmem:[#allocation2 + $0x130] sm:$0xff]
        %v1763 = vld [vmem:[#allocation2 + $0x138] sm:$0xff]
        %v1764 = vld [vmem:[#allocation2 + $0x140] sm:$0xff]
        %v1765 = vld [vmem:[#allocation2 + $0x148] sm:$0xff]
        %v1766 = vld [vmem:[#allocation2 + $0x150] sm:$0xff]
        %v1767 = vld [vmem:[#allocation2 + $0x158] sm:$0xff]
        %v1768 = vld [vmem:[#allocation2 + $0x160] sm:$0xff]
        %v1769 = vld [vmem:[#allocation2 + $0x168] sm:$0xff]
        %v1770 = vld [vmem:[#allocation2 + $0x170] sm:$0xff]
        %v1771 = vld [vmem:[#allocation2 + $0x178] sm:$0xff]
        %v1772 = vld [vmem:[#allocation2 + $0x180] sm:$0xff]
        %v1773 = vld [vmem:[#allocation2 + $0x188] sm:$0xff]
        %v1774 = vld [vmem:[#allocation2 + $0x190] sm:$0xff]
        %v1775 = vld [vmem:[#allocation2 + $0x198] sm:$0xff]
        %v1776 = vld [vmem:[#allocation2 + $0x1a0] sm:$0xff]
        %v1777 = vld [vmem:[#allocation2 + $0x1a8] sm:$0xff]
        %v1778 = vld [vmem:[#allocation2 + $0x1b0] sm:$0xff]
        %v1779 = vld [vmem:[#allocation2 + $0x1b8] sm:$0xff]
        %v1780 = vld [vmem:[#allocation2 + $0x1c0] sm:$0xff]
        %v1781 = vld [vmem:[#allocation2 + $0x1c8] sm:$0xff]
        %v1782 = vld [vmem:[#allocation2 + $0x1d0] sm:$0xff]
        %v1783 = vld [vmem:[#allocation2 + $0x1d8] sm:$0xff]
        %v1784 = vld [vmem:[#allocation2 + $0x1e0] sm:$0xff]
        %v1785 = vld [vmem:[#allocation2 + $0x1e8] sm:$0xff]
        %v1786 = vld [vmem:[#allocation2 + $0x1f0] sm:$0xff]
        %v1787 = vld [vmem:[#allocation2 + $0x1f8] sm:$0xff]
        %v1788 = vld [vmem:[#allocation2 + $0x200] sm:$0xff]
        %v1789 = vld [vmem:[#allocation2 + $0x208] sm:$0xff]
        %v1790 = vld [vmem:[#allocation2 + $0x210] sm:$0xff]
        %v1791 = vld [vmem:[#allocation2 + $0x218] sm:$0xff]
        %v1792 = vld [vmem:[#allocation2 + $0x220] sm:$0xff]
        %v1793 = vld [vmem:[#allocation2 + $0x228] sm:$0xff]
        %v1794 = vld [vmem:[#allocation2 + $0x230] sm:$0xff]
        %v1795 = vld [vmem:[#allocation2 + $0x238] sm:$0xff]
        %v1796 = vld [vmem:[#allocation2 + $0x240] sm:$0xff]
        %v1797 = vld [vmem:[#allocation2 + $0x248] sm:$0xff]
        %v1798 = vld [vmem:[#allocation2 + $0x250] sm:$0xff]
        %v1799 = vld [vmem:[#allocation2 + $0x258] sm:$0xff]
        %v1800 = vld [vmem:[#allocation2 + $0x260] sm:$0xff]
        %v1801 = vld [vmem:[#allocation2 + $0x268] sm:$0xff]
        %v1802 = vld [vmem:[#allocation2 + $0x270] sm:$0xff]
        %v1803 = vld [vmem:[#allocation2 + $0x278] sm:$0xff]
        %v1804 = vld [vmem:[#allocation2 + $0x280] sm:$0xff]
        %v1805 = vld [vmem:[#allocation2 + $0x288] sm:$0xff]
        %v1806 = vld [vmem:[#allocation2 + $0x290] sm:$0xff]
        %v1807 = vld [vmem:[#allocation2 + $0x298] sm:$0xff]
        %v1808 = vld [vmem:[#allocation2 + $0x2a0] sm:$0xff]
        %v1809 = vld [vmem:[#allocation2 + $0x2a8] sm:$0xff]
        %v1810 = vld [vmem:[#allocation2 + $0x2b0] sm:$0xff]
        %v1811 = vld [vmem:[#allocation2 + $0x2b8] sm:$0xff]
        %v1812 = vld [vmem:[#allocation2 + $0x2c0] sm:$0xff]
        %v1813 = vld [vmem:[#allocation2 + $0x2c8] sm:$0xff]
        %v1814 = vld [vmem:[#allocation2 + $0x2d0] sm:$0xff]
        %v1815 = vld [vmem:[#allocation2 + $0x2d8] sm:$0xff]
        %v1816 = vld [vmem:[#allocation2 + $0x2e0] sm:$0xff]
        %v1817 = vld [vmem:[#allocation2 + $0x2e8] sm:$0xff]
        %v1818 = vld [vmem:[#allocation2 + $0x2f0] sm:$0xff]
        %v1819 = vld [vmem:[#allocation2 + $0x2f8] sm:$0xff]
        %v1820 = vld [vmem:[#allocation2 + $0x300] sm:$0xff]
        %v1821 = vld [vmem:[#allocation2 + $0x308] sm:$0xff]
        %v1822 = vld [vmem:[#allocation2 + $0x310] sm:$0xff]
        %v1823 = vld [vmem:[#allocation2 + $0x318] sm:$0xff]
        %v1824 = vld [vmem:[#allocation2 + $0x320] sm:$0xff]
        %v1825 = vld [vmem:[#allocation2 + $0x328] sm:$0xff]
        %v1826 = vld [vmem:[#allocation2 + $0x330] sm:$0xff]
        %v1827 = vld [vmem:[#allocation2 + $0x338] sm:$0xff]
        %v1828 = vld [vmem:[#allocation2 + $0x340] sm:$0xff]
        %v1829 = vld [vmem:[#allocation2 + $0x348] sm:$0xff]
        %v1830 = vld [vmem:[#allocation2 + $0x350] sm:$0xff]
        %v1831 = vld [vmem:[#allocation2 + $0x358] sm:$0xff]
        %v1832 = vld [vmem:[#allocation2 + $0x360] sm:$0xff]
        %v1833 = vld [vmem:[#allocation2 + $0x368] sm:$0xff]
        %v1834 = vld [vmem:[#allocation2 + $0x370] sm:$0xff]
        %v1835 = vld [vmem:[#allocation2 + $0x378] sm:$0xff]
        %v1836 = vld [vmem:[#allocation2 + $0x380] sm:$0xff]
        %v1837 = vld [vmem:[#allocation2 + $0x388] sm:$0xff]
        %v1838 = vld [vmem:[#allocation2 + $0x390] sm:$0xff]
        %v1839 = vld [vmem:[#allocation2 + $0x398] sm:$0xff]
        %v1840 = vld [vmem:[#allocation2 + $0x3a0] sm:$0xff]
        %v1841 = vld [vmem:[#allocation2 + $0x3a8] sm:$0xff]
        %v1842 = vld [vmem:[#allocation2 + $0x3b0] sm:$0xff]
        %v1843 = vld [vmem:[#allocation2 + $0x3b8] sm:$0xff]
        %v1844 = vld [vmem:[#allocation2 + $0x3c0] sm:$0xff]
        %v1845 = vld [vmem:[#allocation2 + $0x3c8] sm:$0xff]
        %v1846 = vld [vmem:[#allocation2 + $0x3d0] sm:$0xff]
        %v1847 = vld [vmem:[#allocation2 + $0x3d8] sm:$0xff]
        %v1848 = vld [vmem:[#allocation2 + $0x3e0] sm:$0xff]
        %v1849 = vld [vmem:[#allocation2 + $0x3e8] sm:$0xff]
        %v1850 = vld [vmem:[#allocation2 + $0x3f0] sm:$0xff]
        %v1851 = vld [vmem:[#allocation2 + $0x3f8] sm:$0xff]
        %1852 = vmatpush.msra.mxu0 %v1739
        %1853 = vmatpush.msra.mxu0 %v1738
        %1854 = vmatpush.msra.mxu0 %v1737
        %1855 = vmatpush.msra.mxu0 %v1736
        %1856 = vmatpush.msra.mxu0 %v1735
        %1857 = vmatpush.msra.mxu0 %v1734
        %1858 = vmatpush.msra.mxu0 %v1733
        %1859 = vmatpush.msra.mxu0 %v1732
        %1860 = vmatpush.msra.mxu0 %v1731
        %1861 = vmatpush.msra.mxu0 %v1730
        %1862 = vmatpush.msra.mxu0 %v1729
        %1863 = vmatpush.msra.mxu0 %v1728
        %1864 = vmatpush.msra.mxu0 %v1727
        %1865 = vmatpush.msra.mxu0 %v1726
        %1866 = vmatpush.msra.mxu0 %v1725
        %1867 = vmatpush.msra.mxu0 %v1724
        %1868 = vmatmul.f32.gmra.mxu0 %v1468
        %v1869 = vpop.f32.mrf.mxu0
        %v1870 = vadd.f32 0.0, %v1869
        %1871 = vmatmul.f32.gmra.mxu0 %v1476
        %v1872 = vpop.f32.mrf.mxu0
        %v1873 = vadd.f32 0.0, %v1872
        %1874 = vmatmul.f32.gmra.mxu0 %v1484
        %v1875 = vpop.f32.mrf.mxu0
        %v1876 = vadd.f32 0.0, %v1875
        %1877 = vmatmul.f32.gmra.mxu0 %v1492
        %v1878 = vpop.f32.mrf.mxu0
        %v1879 = vadd.f32 0.0, %v1878
        %1880 = vmatmul.f32.gmra.mxu0 %v1500
        %v1881 = vpop.f32.mrf.mxu0
        %v1882 = vadd.f32 0.0, %v1881
        %1883 = vmatmul.f32.gmra.mxu0 %v1508
        %v1884 = vpop.f32.mrf.mxu0
        %v1885 = vadd.f32 0.0, %v1884
        %1886 = vmatmul.f32.gmra.mxu0 %v1516
        %v1887 = vpop.f32.mrf.mxu0
        %v1888 = vadd.f32 0.0, %v1887
        %1889 = vmatmul.f32.gmra.mxu0 %v1524
        %v1890 = vpop.f32.mrf.mxu0
        %v1891 = vadd.f32 0.0, %v1890
        %1892 = vmatmul.f32.gmra.mxu0 %v1532
        %v1893 = vpop.f32.mrf.mxu0
        %v1894 = vadd.f32 0.0, %v1893
        %1895 = vmatmul.f32.gmra.mxu0 %v1540
        %v1896 = vpop.f32.mrf.mxu0
        %v1897 = vadd.f32 0.0, %v1896
        %1898 = vmatmul.f32.gmra.mxu0 %v1548
        %v1899 = vpop.f32.mrf.mxu0
        %v1900 = vadd.f32 0.0, %v1899
        %1901 = vmatmul.f32.gmra.mxu0 %v1556
        %v1902 = vpop.f32.mrf.mxu0
        %v1903 = vadd.f32 0.0, %v1902
        %1904 = vmatmul.f32.gmra.mxu0 %v1564
        %v1905 = vpop.f32.mrf.mxu0
        %v1906 = vadd.f32 0.0, %v1905
        %1907 = vmatmul.f32.gmra.mxu0 %v1572
        %v1908 = vpop.f32.mrf.mxu0
        %v1909 = vadd.f32 0.0, %v1908
        %1910 = vmatmul.f32.gmra.mxu0 %v1580
        %v1911 = vpop.f32.mrf.mxu0
        %v1912 = vadd.f32 0.0, %v1911
        %1913 = vmatmul.f32.gmra.mxu0 %v1588
        %v1914 = vpop.f32.mrf.mxu0
        %v1915 = vadd.f32 0.0, %v1914
        %1916 = vmatmul.f32.gmra.mxu0 %v1596
        %v1917 = vpop.f32.mrf.mxu0
        %v1918 = vadd.f32 0.0, %v1917
        %1919 = vmatmul.f32.gmra.mxu0 %v1604
        %v1920 = vpop.f32.mrf.mxu0
        %v1921 = vadd.f32 0.0, %v1920
        %1922 = vmatmul.f32.gmra.mxu0 %v1612
        %v1923 = vpop.f32.mrf.mxu0
        %v1924 = vadd.f32 0.0, %v1923
        %1925 = vmatmul.f32.gmra.mxu0 %v1620
        %v1926 = vpop.f32.mrf.mxu0
        %v1927 = vadd.f32 0.0, %v1926
        %1928 = vmatmul.f32.gmra.mxu0 %v1628
        %v1929 = vpop.f32.mrf.mxu0
        %v1930 = vadd.f32 0.0, %v1929
        %1931 = vmatmul.f32.gmra.mxu0 %v1636
        %v1932 = vpop.f32.mrf.mxu0
        %v1933 = vadd.f32 0.0, %v1932
        %1934 = vmatmul.f32.gmra.mxu0 %v1644
        %v1935 = vpop.f32.mrf.mxu0
        %v1936 = vadd.f32 0.0, %v1935
        %1937 = vmatmul.f32.gmra.mxu0 %v1652
        %v1938 = vpop.f32.mrf.mxu0
        %v1939 = vadd.f32 0.0, %v1938
        %1940 = vmatmul.f32.gmra.mxu0 %v1660
        %v1941 = vpop.f32.mrf.mxu0
        %v1942 = vadd.f32 0.0, %v1941
        %1943 = vmatmul.f32.gmra.mxu0 %v1668
        %v1944 = vpop.f32.mrf.mxu0
        %v1945 = vadd.f32 0.0, %v1944
        %1946 = vmatmul.f32.gmra.mxu0 %v1676
        %v1947 = vpop.f32.mrf.mxu0
        %v1948 = vadd.f32 0.0, %v1947
        %1949 = vmatmul.f32.gmra.mxu0 %v1684
        %v1950 = vpop.f32.mrf.mxu0
        %v1951 = vadd.f32 0.0, %v1950
        %1952 = vmatmul.f32.gmra.mxu0 %v1692
        %v1953 = vpop.f32.mrf.mxu0
        %v1954 = vadd.f32 0.0, %v1953
        %1955 = vmatmul.f32.gmra.mxu0 %v1700
        %v1956 = vpop.f32.mrf.mxu0
        %v1957 = vadd.f32 0.0, %v1956
        %1958 = vmatmul.f32.gmra.mxu0 %v1708
        %v1959 = vpop.f32.mrf.mxu0
        %v1960 = vadd.f32 0.0, %v1959
        %1961 = vmatmul.f32.gmra.mxu0 %v1716
        %v1962 = vpop.f32.mrf.mxu0
        %v1963 = vadd.f32 0.0, %v1962
        %1964 = vdwg.mxu0
        %1965 = vmatpush.msra.mxu0 %v1755
        %1966 = vmatpush.msra.mxu0 %v1754
        %1967 = vmatpush.msra.mxu0 %v1753
        %1968 = vmatpush.msra.mxu0 %v1752
        %1969 = vmatpush.msra.mxu0 %v1751
        %1970 = vmatpush.msra.mxu0 %v1750
        %1971 = vmatpush.msra.mxu0 %v1749
        %1972 = vmatpush.msra.mxu0 %v1748
        %1973 = vmatpush.msra.mxu0 %v1747
        %1974 = vmatpush.msra.mxu0 %v1746
        %1975 = vmatpush.msra.mxu0 %v1745
        %1976 = vmatpush.msra.mxu0 %v1744
        %1977 = vmatpush.msra.mxu0 %v1743
        %1978 = vmatpush.msra.mxu0 %v1742
        %1979 = vmatpush.msra.mxu0 %v1741
        %1980 = vmatpush.msra.mxu0 %v1740
        %1981 = vmatmul.f32.gmra.mxu0 %v1469
        %v1982 = vpop.f32.mrf.mxu0
        %v1983 = vadd.f32 %v1870, %v1982
        %1984 = vmatmul.f32.gmra.mxu0 %v1477
        %v1985 = vpop.f32.mrf.mxu0
        %v1986 = vadd.f32 %v1873, %v1985
        %1987 = vmatmul.f32.gmra.mxu0 %v1485
        %v1988 = vpop.f32.mrf.mxu0
        %v1989 = vadd.f32 %v1876, %v1988
        %1990 = vmatmul.f32.gmra.mxu0 %v1493
        %v1991 = vpop.f32.mrf.mxu0
        %v1992 = vadd.f32 %v1879, %v1991
        %1993 = vmatmul.f32.gmra.mxu0 %v1501
        %v1994 = vpop.f32.mrf.mxu0
        %v1995 = vadd.f32 %v1882, %v1994
        %1996 = vmatmul.f32.gmra.mxu0 %v1509
        %v1997 = vpop.f32.mrf.mxu0
        %v1998 = vadd.f32 %v1885, %v1997
        %1999 = vmatmul.f32.gmra.mxu0 %v1517
        %v2000 = vpop.f32.mrf.mxu0
        %v2001 = vadd.f32 %v1888, %v2000
        %2002 = vmatmul.f32.gmra.mxu0 %v1525
        %v2003 = vpop.f32.mrf.mxu0
        %v2004 = vadd.f32 %v1891, %v2003
        %2005 = vmatmul.f32.gmra.mxu0 %v1533
        %v2006 = vpop.f32.mrf.mxu0
        %v2007 = vadd.f32 %v1894, %v2006
        %2008 = vmatmul.f32.gmra.mxu0 %v1541
        %v2009 = vpop.f32.mrf.mxu0
        %v2010 = vadd.f32 %v1897, %v2009
        %2011 = vmatmul.f32.gmra.mxu0 %v1549
        %v2012 = vpop.f32.mrf.mxu0
        %v2013 = vadd.f32 %v1900, %v2012
        %2014 = vmatmul.f32.gmra.mxu0 %v1557
        %v2015 = vpop.f32.mrf.mxu0
        %v2016 = vadd.f32 %v1903, %v2015
        %2017 = vmatmul.f32.gmra.mxu0 %v1565
        %v2018 = vpop.f32.mrf.mxu0
        %v2019 = vadd.f32 %v1906, %v2018
        %2020 = vmatmul.f32.gmra.mxu0 %v1573
        %v2021 = vpop.f32.mrf.mxu0
        %v2022 = vadd.f32 %v1909, %v2021
        %2023 = vmatmul.f32.gmra.mxu0 %v1581
        %v2024 = vpop.f32.mrf.mxu0
        %v2025 = vadd.f32 %v1912, %v2024
        %2026 = vmatmul.f32.gmra.mxu0 %v1589
        %v2027 = vpop.f32.mrf.mxu0
        %v2028 = vadd.f32 %v1915, %v2027
        %2029 = vmatmul.f32.gmra.mxu0 %v1597
        %v2030 = vpop.f32.mrf.mxu0
        %v2031 = vadd.f32 %v1918, %v2030
        %2032 = vmatmul.f32.gmra.mxu0 %v1605
        %v2033 = vpop.f32.mrf.mxu0
        %v2034 = vadd.f32 %v1921, %v2033
        %2035 = vmatmul.f32.gmra.mxu0 %v1613
        %v2036 = vpop.f32.mrf.mxu0
        %v2037 = vadd.f32 %v1924, %v2036
        %2038 = vmatmul.f32.gmra.mxu0 %v1621
        %v2039 = vpop.f32.mrf.mxu0
        %v2040 = vadd.f32 %v1927, %v2039
        %2041 = vmatmul.f32.gmra.mxu0 %v1629
        %v2042 = vpop.f32.mrf.mxu0
        %v2043 = vadd.f32 %v1930, %v2042
        %2044 = vmatmul.f32.gmra.mxu0 %v1637
        %v2045 = vpop.f32.mrf.mxu0
        %v2046 = vadd.f32 %v1933, %v2045
        %2047 = vmatmul.f32.gmra.mxu0 %v1645
        %v2048 = vpop.f32.mrf.mxu0
        %v2049 = vadd.f32 %v1936, %v2048
        %2050 = vmatmul.f32.gmra.mxu0 %v1653
        %v2051 = vpop.f32.mrf.mxu0
        %v2052 = vadd.f32 %v1939, %v2051
        %2053 = vmatmul.f32.gmra.mxu0 %v1661
        %v2054 = vpop.f32.mrf.mxu0
        %v2055 = vadd.f32 %v1942, %v2054
        %2056 = vmatmul.f32.gmra.mxu0 %v1669
        %v2057 = vpop.f32.mrf.mxu0
        %v2058 = vadd.f32 %v1945, %v2057
        %2059 = vmatmul.f32.gmra.mxu0 %v1677
        %v2060 = vpop.f32.mrf.mxu0
        %v2061 = vadd.f32 %v1948, %v2060
        %2062 = vmatmul.f32.gmra.mxu0 %v1685
        %v2063 = vpop.f32.mrf.mxu0
        %v2064 = vadd.f32 %v1951, %v2063
        %2065 = vmatmul.f32.gmra.mxu0 %v1693
        %v2066 = vpop.f32.mrf.mxu0
        %v2067 = vadd.f32 %v1954, %v2066
        %2068 = vmatmul.f32.gmra.mxu0 %v1701
        %v2069 = vpop.f32.mrf.mxu0
        %v2070 = vadd.f32 %v1957, %v2069
        %2071 = vmatmul.f32.gmra.mxu0 %v1709
        %v2072 = vpop.f32.mrf.mxu0
        %v2073 = vadd.f32 %v1960, %v2072
        %2074 = vmatmul.f32.gmra.mxu0 %v1717
        %v2075 = vpop.f32.mrf.mxu0
        %v2076 = vadd.f32 %v1963, %v2075
        %2077 = vdwg.mxu0
        %2078 = vmatpush.msra.mxu0 %v1771
        %2079 = vmatpush.msra.mxu0 %v1770
        %2080 = vmatpush.msra.mxu0 %v1769
        %2081 = vmatpush.msra.mxu0 %v1768
        %2082 = vmatpush.msra.mxu0 %v1767
        %2083 = vmatpush.msra.mxu0 %v1766
        %2084 = vmatpush.msra.mxu0 %v1765
        %2085 = vmatpush.msra.mxu0 %v1764
        %2086 = vmatpush.msra.mxu0 %v1763
        %2087 = vmatpush.msra.mxu0 %v1762
        %2088 = vmatpush.msra.mxu0 %v1761
        %2089 = vmatpush.msra.mxu0 %v1760
        %2090 = vmatpush.msra.mxu0 %v1759
        %2091 = vmatpush.msra.mxu0 %v1758
        %2092 = vmatpush.msra.mxu0 %v1757
        %2093 = vmatpush.msra.mxu0 %v1756
        %2094 = vmatmul.f32.gmra.mxu0 %v1470
        %v2095 = vpop.f32.mrf.mxu0
        %v2096 = vadd.f32 %v1983, %v2095
        %2097 = vmatmul.f32.gmra.mxu0 %v1478
        %v2098 = vpop.f32.mrf.mxu0
        %v2099 = vadd.f32 %v1986, %v2098
        %2100 = vmatmul.f32.gmra.mxu0 %v1486
        %v2101 = vpop.f32.mrf.mxu0
        %v2102 = vadd.f32 %v1989, %v2101
        %2103 = vmatmul.f32.gmra.mxu0 %v1494
        %v2104 = vpop.f32.mrf.mxu0
        %v2105 = vadd.f32 %v1992, %v2104
        %2106 = vmatmul.f32.gmra.mxu0 %v1502
        %v2107 = vpop.f32.mrf.mxu0
        %v2108 = vadd.f32 %v1995, %v2107
        %2109 = vmatmul.f32.gmra.mxu0 %v1510
        %v2110 = vpop.f32.mrf.mxu0
        %v2111 = vadd.f32 %v1998, %v2110
        %2112 = vmatmul.f32.gmra.mxu0 %v1518
        %v2113 = vpop.f32.mrf.mxu0
        %v2114 = vadd.f32 %v2001, %v2113
        %2115 = vmatmul.f32.gmra.mxu0 %v1526
        %v2116 = vpop.f32.mrf.mxu0
        %v2117 = vadd.f32 %v2004, %v2116
        %2118 = vmatmul.f32.gmra.mxu0 %v1534
        %v2119 = vpop.f32.mrf.mxu0
        %v2120 = vadd.f32 %v2007, %v2119
        %2121 = vmatmul.f32.gmra.mxu0 %v1542
        %v2122 = vpop.f32.mrf.mxu0
        %v2123 = vadd.f32 %v2010, %v2122
        %2124 = vmatmul.f32.gmra.mxu0 %v1550
        %v2125 = vpop.f32.mrf.mxu0
        %v2126 = vadd.f32 %v2013, %v2125
        %2127 = vmatmul.f32.gmra.mxu0 %v1558
        %v2128 = vpop.f32.mrf.mxu0
        %v2129 = vadd.f32 %v2016, %v2128
        %2130 = vmatmul.f32.gmra.mxu0 %v1566
        %v2131 = vpop.f32.mrf.mxu0
        %v2132 = vadd.f32 %v2019, %v2131
        %2133 = vmatmul.f32.gmra.mxu0 %v1574
        %v2134 = vpop.f32.mrf.mxu0
        %v2135 = vadd.f32 %v2022, %v2134
        %2136 = vmatmul.f32.gmra.mxu0 %v1582
        %v2137 = vpop.f32.mrf.mxu0
        %v2138 = vadd.f32 %v2025, %v2137
        %2139 = vmatmul.f32.gmra.mxu0 %v1590
        %v2140 = vpop.f32.mrf.mxu0
        %v2141 = vadd.f32 %v2028, %v2140
        %2142 = vmatmul.f32.gmra.mxu0 %v1598
        %v2143 = vpop.f32.mrf.mxu0
        %v2144 = vadd.f32 %v2031, %v2143
        %2145 = vmatmul.f32.gmra.mxu0 %v1606
        %v2146 = vpop.f32.mrf.mxu0
        %v2147 = vadd.f32 %v2034, %v2146
        %2148 = vmatmul.f32.gmra.mxu0 %v1614
        %v2149 = vpop.f32.mrf.mxu0
        %v2150 = vadd.f32 %v2037, %v2149
        %2151 = vmatmul.f32.gmra.mxu0 %v1622
        %v2152 = vpop.f32.mrf.mxu0
        %v2153 = vadd.f32 %v2040, %v2152
        %2154 = vmatmul.f32.gmra.mxu0 %v1630
        %v2155 = vpop.f32.mrf.mxu0
        %v2156 = vadd.f32 %v2043, %v2155
        %2157 = vmatmul.f32.gmra.mxu0 %v1638
        %v2158 = vpop.f32.mrf.mxu0
        %v2159 = vadd.f32 %v2046, %v2158
        %2160 = vmatmul.f32.gmra.mxu0 %v1646
        %v2161 = vpop.f32.mrf.mxu0
        %v2162 = vadd.f32 %v2049, %v2161
        %2163 = vmatmul.f32.gmra.mxu0 %v1654
        %v2164 = vpop.f32.mrf.mxu0
        %v2165 = vadd.f32 %v2052, %v2164
        %2166 = vmatmul.f32.gmra.mxu0 %v1662
        %v2167 = vpop.f32.mrf.mxu0
        %v2168 = vadd.f32 %v2055, %v2167
        %2169 = vmatmul.f32.gmra.mxu0 %v1670
        %v2170 = vpop.f32.mrf.mxu0
        %v2171 = vadd.f32 %v2058, %v2170
        %2172 = vmatmul.f32.gmra.mxu0 %v1678
        %v2173 = vpop.f32.mrf.mxu0
        %v2174 = vadd.f32 %v2061, %v2173
        %2175 = vmatmul.f32.gmra.mxu0 %v1686
        %v2176 = vpop.f32.mrf.mxu0
        %v2177 = vadd.f32 %v2064, %v2176
        %2178 = vmatmul.f32.gmra.mxu0 %v1694
        %v2179 = vpop.f32.mrf.mxu0
        %v2180 = vadd.f32 %v2067, %v2179
        %2181 = vmatmul.f32.gmra.mxu0 %v1702
        %v2182 = vpop.f32.mrf.mxu0
        %v2183 = vadd.f32 %v2070, %v2182
        %2184 = vmatmul.f32.gmra.mxu0 %v1710
        %v2185 = vpop.f32.mrf.mxu0
        %v2186 = vadd.f32 %v2073, %v2185
        %2187 = vmatmul.f32.gmra.mxu0 %v1718
        %v2188 = vpop.f32.mrf.mxu0
        %v2189 = vadd.f32 %v2076, %v2188
        %2190 = vdwg.mxu0
        %2191 = vmatpush.msra.mxu0 %v1787
        %2192 = vmatpush.msra.mxu0 %v1786
        %2193 = vmatpush.msra.mxu0 %v1785
        %2194 = vmatpush.msra.mxu0 %v1784
        %2195 = vmatpush.msra.mxu0 %v1783
        %2196 = vmatpush.msra.mxu0 %v1782
        %2197 = vmatpush.msra.mxu0 %v1781
        %2198 = vmatpush.msra.mxu0 %v1780
        %2199 = vmatpush.msra.mxu0 %v1779
        %2200 = vmatpush.msra.mxu0 %v1778
        %2201 = vmatpush.msra.mxu0 %v1777
        %2202 = vmatpush.msra.mxu0 %v1776
        %2203 = vmatpush.msra.mxu0 %v1775
        %2204 = vmatpush.msra.mxu0 %v1774
        %2205 = vmatpush.msra.mxu0 %v1773
        %2206 = vmatpush.msra.mxu0 %v1772
        %2207 = vmatmul.f32.gmra.mxu0 %v1471
        %v2208 = vpop.f32.mrf.mxu0
        %v2209 = vadd.f32 %v2096, %v2208
        %2210 = vmatmul.f32.gmra.mxu0 %v1479
        %v2211 = vpop.f32.mrf.mxu0
        %v2212 = vadd.f32 %v2099, %v2211
        %2213 = vmatmul.f32.gmra.mxu0 %v1487
        %v2214 = vpop.f32.mrf.mxu0
        %v2215 = vadd.f32 %v2102, %v2214
        %2216 = vmatmul.f32.gmra.mxu0 %v1495
        %v2217 = vpop.f32.mrf.mxu0
        %v2218 = vadd.f32 %v2105, %v2217
        %2219 = vmatmul.f32.gmra.mxu0 %v1503
        %v2220 = vpop.f32.mrf.mxu0
        %v2221 = vadd.f32 %v2108, %v2220
        %2222 = vmatmul.f32.gmra.mxu0 %v1511
        %v2223 = vpop.f32.mrf.mxu0
        %v2224 = vadd.f32 %v2111, %v2223
        %2225 = vmatmul.f32.gmra.mxu0 %v1519
        %v2226 = vpop.f32.mrf.mxu0
        %v2227 = vadd.f32 %v2114, %v2226
        %2228 = vmatmul.f32.gmra.mxu0 %v1527
        %v2229 = vpop.f32.mrf.mxu0
        %v2230 = vadd.f32 %v2117, %v2229
        %2231 = vmatmul.f32.gmra.mxu0 %v1535
        %v2232 = vpop.f32.mrf.mxu0
        %v2233 = vadd.f32 %v2120, %v2232
        %2234 = vmatmul.f32.gmra.mxu0 %v1543
        %v2235 = vpop.f32.mrf.mxu0
        %v2236 = vadd.f32 %v2123, %v2235
        %2237 = vmatmul.f32.gmra.mxu0 %v1551
        %v2238 = vpop.f32.mrf.mxu0
        %v2239 = vadd.f32 %v2126, %v2238
        %2240 = vmatmul.f32.gmra.mxu0 %v1559
        %v2241 = vpop.f32.mrf.mxu0
        %v2242 = vadd.f32 %v2129, %v2241
        %2243 = vmatmul.f32.gmra.mxu0 %v1567
        %v2244 = vpop.f32.mrf.mxu0
        %v2245 = vadd.f32 %v2132, %v2244
        %2246 = vmatmul.f32.gmra.mxu0 %v1575
        %v2247 = vpop.f32.mrf.mxu0
        %v2248 = vadd.f32 %v2135, %v2247
        %2249 = vmatmul.f32.gmra.mxu0 %v1583
        %v2250 = vpop.f32.mrf.mxu0
        %v2251 = vadd.f32 %v2138, %v2250
        %2252 = vmatmul.f32.gmra.mxu0 %v1591
        %v2253 = vpop.f32.mrf.mxu0
        %v2254 = vadd.f32 %v2141, %v2253
        %2255 = vmatmul.f32.gmra.mxu0 %v1599
        %v2256 = vpop.f32.mrf.mxu0
        %v2257 = vadd.f32 %v2144, %v2256
        %2258 = vmatmul.f32.gmra.mxu0 %v1607
        %v2259 = vpop.f32.mrf.mxu0
        %v2260 = vadd.f32 %v2147, %v2259
        %2261 = vmatmul.f32.gmra.mxu0 %v1615
        %v2262 = vpop.f32.mrf.mxu0
        %v2263 = vadd.f32 %v2150, %v2262
        %2264 = vmatmul.f32.gmra.mxu0 %v1623
        %v2265 = vpop.f32.mrf.mxu0
        %v2266 = vadd.f32 %v2153, %v2265
        %2267 = vmatmul.f32.gmra.mxu0 %v1631
        %v2268 = vpop.f32.mrf.mxu0
        %v2269 = vadd.f32 %v2156, %v2268
        %2270 = vmatmul.f32.gmra.mxu0 %v1639
        %v2271 = vpop.f32.mrf.mxu0
        %v2272 = vadd.f32 %v2159, %v2271
        %2273 = vmatmul.f32.gmra.mxu0 %v1647
        %v2274 = vpop.f32.mrf.mxu0
        %v2275 = vadd.f32 %v2162, %v2274
        %2276 = vmatmul.f32.gmra.mxu0 %v1655
        %v2277 = vpop.f32.mrf.mxu0
        %v2278 = vadd.f32 %v2165, %v2277
        %2279 = vmatmul.f32.gmra.mxu0 %v1663
        %v2280 = vpop.f32.mrf.mxu0
        %v2281 = vadd.f32 %v2168, %v2280
        %2282 = vmatmul.f32.gmra.mxu0 %v1671
        %v2283 = vpop.f32.mrf.mxu0
        %v2284 = vadd.f32 %v2171, %v2283
        %2285 = vmatmul.f32.gmra.mxu0 %v1679
        %v2286 = vpop.f32.mrf.mxu0
        %v2287 = vadd.f32 %v2174, %v2286
        %2288 = vmatmul.f32.gmra.mxu0 %v1687
        %v2289 = vpop.f32.mrf.mxu0
        %v2290 = vadd.f32 %v2177, %v2289
        %2291 = vmatmul.f32.gmra.mxu0 %v1695
        %v2292 = vpop.f32.mrf.mxu0
        %v2293 = vadd.f32 %v2180, %v2292
        %2294 = vmatmul.f32.gmra.mxu0 %v1703
        %v2295 = vpop.f32.mrf.mxu0
        %v2296 = vadd.f32 %v2183, %v2295
        %2297 = vmatmul.f32.gmra.mxu0 %v1711
        %v2298 = vpop.f32.mrf.mxu0
        %v2299 = vadd.f32 %v2186, %v2298
        %2300 = vmatmul.f32.gmra.mxu0 %v1719
        %v2301 = vpop.f32.mrf.mxu0
        %v2302 = vadd.f32 %v2189, %v2301
        %2303 = vdwg.mxu0
        %2304 = vmatpush.msra.mxu0 %v1803
        %2305 = vmatpush.msra.mxu0 %v1802
        %2306 = vmatpush.msra.mxu0 %v1801
        %2307 = vmatpush.msra.mxu0 %v1800
        %2308 = vmatpush.msra.mxu0 %v1799
        %2309 = vmatpush.msra.mxu0 %v1798
        %2310 = vmatpush.msra.mxu0 %v1797
        %2311 = vmatpush.msra.mxu0 %v1796
        %2312 = vmatpush.msra.mxu0 %v1795
        %2313 = vmatpush.msra.mxu0 %v1794
        %2314 = vmatpush.msra.mxu0 %v1793
        %2315 = vmatpush.msra.mxu0 %v1792
        %2316 = vmatpush.msra.mxu0 %v1791
        %2317 = vmatpush.msra.mxu0 %v1790
        %2318 = vmatpush.msra.mxu0 %v1789
        %2319 = vmatpush.msra.mxu0 %v1788
        %2320 = vmatmul.f32.gmra.mxu0 %v1472
        %v2321 = vpop.f32.mrf.mxu0
        %v2322 = vadd.f32 %v2209, %v2321
        %2323 = vmatmul.f32.gmra.mxu0 %v1480
        %v2324 = vpop.f32.mrf.mxu0
        %v2325 = vadd.f32 %v2212, %v2324
        %2326 = vmatmul.f32.gmra.mxu0 %v1488
        %v2327 = vpop.f32.mrf.mxu0
        %v2328 = vadd.f32 %v2215, %v2327
        %2329 = vmatmul.f32.gmra.mxu0 %v1496
        %v2330 = vpop.f32.mrf.mxu0
        %v2331 = vadd.f32 %v2218, %v2330
        %2332 = vmatmul.f32.gmra.mxu0 %v1504
        %v2333 = vpop.f32.mrf.mxu0
        %v2334 = vadd.f32 %v2221, %v2333
        %2335 = vmatmul.f32.gmra.mxu0 %v1512
        %v2336 = vpop.f32.mrf.mxu0
        %v2337 = vadd.f32 %v2224, %v2336
        %2338 = vmatmul.f32.gmra.mxu0 %v1520
        %v2339 = vpop.f32.mrf.mxu0
        %v2340 = vadd.f32 %v2227, %v2339
        %2341 = vmatmul.f32.gmra.mxu0 %v1528
        %v2342 = vpop.f32.mrf.mxu0
        %v2343 = vadd.f32 %v2230, %v2342
        %2344 = vmatmul.f32.gmra.mxu0 %v1536
        %v2345 = vpop.f32.mrf.mxu0
        %v2346 = vadd.f32 %v2233, %v2345
        %2347 = vmatmul.f32.gmra.mxu0 %v1544
        %v2348 = vpop.f32.mrf.mxu0
        %v2349 = vadd.f32 %v2236, %v2348
        %2350 = vmatmul.f32.gmra.mxu0 %v1552
        %v2351 = vpop.f32.mrf.mxu0
        %v2352 = vadd.f32 %v2239, %v2351
        %2353 = vmatmul.f32.gmra.mxu0 %v1560
        %v2354 = vpop.f32.mrf.mxu0
        %v2355 = vadd.f32 %v2242, %v2354
        %2356 = vmatmul.f32.gmra.mxu0 %v1568
        %v2357 = vpop.f32.mrf.mxu0
        %v2358 = vadd.f32 %v2245, %v2357
        %2359 = vmatmul.f32.gmra.mxu0 %v1576
        %v2360 = vpop.f32.mrf.mxu0
        %v2361 = vadd.f32 %v2248, %v2360
        %2362 = vmatmul.f32.gmra.mxu0 %v1584
        %v2363 = vpop.f32.mrf.mxu0
        %v2364 = vadd.f32 %v2251, %v2363
        %2365 = vmatmul.f32.gmra.mxu0 %v1592
        %v2366 = vpop.f32.mrf.mxu0
        %v2367 = vadd.f32 %v2254, %v2366
        %2368 = vmatmul.f32.gmra.mxu0 %v1600
        %v2369 = vpop.f32.mrf.mxu0
        %v2370 = vadd.f32 %v2257, %v2369
        %2371 = vmatmul.f32.gmra.mxu0 %v1608
        %v2372 = vpop.f32.mrf.mxu0
        %v2373 = vadd.f32 %v2260, %v2372
        %2374 = vmatmul.f32.gmra.mxu0 %v1616
        %v2375 = vpop.f32.mrf.mxu0
        %v2376 = vadd.f32 %v2263, %v2375
        %2377 = vmatmul.f32.gmra.mxu0 %v1624
        %v2378 = vpop.f32.mrf.mxu0
        %v2379 = vadd.f32 %v2266, %v2378
        %2380 = vmatmul.f32.gmra.mxu0 %v1632
        %v2381 = vpop.f32.mrf.mxu0
        %v2382 = vadd.f32 %v2269, %v2381
        %2383 = vmatmul.f32.gmra.mxu0 %v1640
        %v2384 = vpop.f32.mrf.mxu0
        %v2385 = vadd.f32 %v2272, %v2384
        %2386 = vmatmul.f32.gmra.mxu0 %v1648
        %v2387 = vpop.f32.mrf.mxu0
        %v2388 = vadd.f32 %v2275, %v2387
        %2389 = vmatmul.f32.gmra.mxu0 %v1656
        %v2390 = vpop.f32.mrf.mxu0
        %v2391 = vadd.f32 %v2278, %v2390
        %2392 = vmatmul.f32.gmra.mxu0 %v1664
        %v2393 = vpop.f32.mrf.mxu0
        %v2394 = vadd.f32 %v2281, %v2393
        %2395 = vmatmul.f32.gmra.mxu0 %v1672
        %v2396 = vpop.f32.mrf.mxu0
        %v2397 = vadd.f32 %v2284, %v2396
        %2398 = vmatmul.f32.gmra.mxu0 %v1680
        %v2399 = vpop.f32.mrf.mxu0
        %v2400 = vadd.f32 %v2287, %v2399
        %2401 = vmatmul.f32.gmra.mxu0 %v1688
        %v2402 = vpop.f32.mrf.mxu0
        %v2403 = vadd.f32 %v2290, %v2402
        %2404 = vmatmul.f32.gmra.mxu0 %v1696
        %v2405 = vpop.f32.mrf.mxu0
        %v2406 = vadd.f32 %v2293, %v2405
        %2407 = vmatmul.f32.gmra.mxu0 %v1704
        %v2408 = vpop.f32.mrf.mxu0
        %v2409 = vadd.f32 %v2296, %v2408
        %2410 = vmatmul.f32.gmra.mxu0 %v1712
        %v2411 = vpop.f32.mrf.mxu0
        %v2412 = vadd.f32 %v2299, %v2411
        %2413 = vmatmul.f32.gmra.mxu0 %v1720
        %v2414 = vpop.f32.mrf.mxu0
        %v2415 = vadd.f32 %v2302, %v2414
        %2416 = vdwg.mxu0
        %2417 = vmatpush.msra.mxu0 %v1819
        %2418 = vmatpush.msra.mxu0 %v1818
        %2419 = vmatpush.msra.mxu0 %v1817
        %2420 = vmatpush.msra.mxu0 %v1816
        %2421 = vmatpush.msra.mxu0 %v1815
        %2422 = vmatpush.msra.mxu0 %v1814
        %2423 = vmatpush.msra.mxu0 %v1813
        %2424 = vmatpush.msra.mxu0 %v1812
        %2425 = vmatpush.msra.mxu0 %v1811
        %2426 = vmatpush.msra.mxu0 %v1810
        %2427 = vmatpush.msra.mxu0 %v1809
        %2428 = vmatpush.msra.mxu0 %v1808
        %2429 = vmatpush.msra.mxu0 %v1807
        %2430 = vmatpush.msra.mxu0 %v1806
        %2431 = vmatpush.msra.mxu0 %v1805
        %2432 = vmatpush.msra.mxu0 %v1804
        %2433 = vmatmul.f32.gmra.mxu0 %v1473
        %v2434 = vpop.f32.mrf.mxu0
        %v2435 = vadd.f32 %v2322, %v2434
        %2436 = vmatmul.f32.gmra.mxu0 %v1481
        %v2437 = vpop.f32.mrf.mxu0
        %v2438 = vadd.f32 %v2325, %v2437
        %2439 = vmatmul.f32.gmra.mxu0 %v1489
        %v2440 = vpop.f32.mrf.mxu0
        %v2441 = vadd.f32 %v2328, %v2440
        %2442 = vmatmul.f32.gmra.mxu0 %v1497
        %v2443 = vpop.f32.mrf.mxu0
        %v2444 = vadd.f32 %v2331, %v2443
        %2445 = vmatmul.f32.gmra.mxu0 %v1505
        %v2446 = vpop.f32.mrf.mxu0
        %v2447 = vadd.f32 %v2334, %v2446
        %2448 = vmatmul.f32.gmra.mxu0 %v1513
        %v2449 = vpop.f32.mrf.mxu0
        %v2450 = vadd.f32 %v2337, %v2449
        %2451 = vmatmul.f32.gmra.mxu0 %v1521
        %v2452 = vpop.f32.mrf.mxu0
        %v2453 = vadd.f32 %v2340, %v2452
        %2454 = vmatmul.f32.gmra.mxu0 %v1529
        %v2455 = vpop.f32.mrf.mxu0
        %v2456 = vadd.f32 %v2343, %v2455
        %2457 = vmatmul.f32.gmra.mxu0 %v1537
        %v2458 = vpop.f32.mrf.mxu0
        %v2459 = vadd.f32 %v2346, %v2458
        %2460 = vmatmul.f32.gmra.mxu0 %v1545
        %v2461 = vpop.f32.mrf.mxu0
        %v2462 = vadd.f32 %v2349, %v2461
        %2463 = vmatmul.f32.gmra.mxu0 %v1553
        %v2464 = vpop.f32.mrf.mxu0
        %v2465 = vadd.f32 %v2352, %v2464
        %2466 = vmatmul.f32.gmra.mxu0 %v1561
        %v2467 = vpop.f32.mrf.mxu0
        %v2468 = vadd.f32 %v2355, %v2467
        %2469 = vmatmul.f32.gmra.mxu0 %v1569
        %v2470 = vpop.f32.mrf.mxu0
        %v2471 = vadd.f32 %v2358, %v2470
        %2472 = vmatmul.f32.gmra.mxu0 %v1577
        %v2473 = vpop.f32.mrf.mxu0
        %v2474 = vadd.f32 %v2361, %v2473
        %2475 = vmatmul.f32.gmra.mxu0 %v1585
        %v2476 = vpop.f32.mrf.mxu0
        %v2477 = vadd.f32 %v2364, %v2476
        %2478 = vmatmul.f32.gmra.mxu0 %v1593
        %v2479 = vpop.f32.mrf.mxu0
        %v2480 = vadd.f32 %v2367, %v2479
        %2481 = vmatmul.f32.gmra.mxu0 %v1601
        %v2482 = vpop.f32.mrf.mxu0
        %v2483 = vadd.f32 %v2370, %v2482
        %2484 = vmatmul.f32.gmra.mxu0 %v1609
        %v2485 = vpop.f32.mrf.mxu0
        %v2486 = vadd.f32 %v2373, %v2485
        %2487 = vmatmul.f32.gmra.mxu0 %v1617
        %v2488 = vpop.f32.mrf.mxu0
        %v2489 = vadd.f32 %v2376, %v2488
        %2490 = vmatmul.f32.gmra.mxu0 %v1625
        %v2491 = vpop.f32.mrf.mxu0
        %v2492 = vadd.f32 %v2379, %v2491
        %2493 = vmatmul.f32.gmra.mxu0 %v1633
        %v2494 = vpop.f32.mrf.mxu0
        %v2495 = vadd.f32 %v2382, %v2494
        %2496 = vmatmul.f32.gmra.mxu0 %v1641
        %v2497 = vpop.f32.mrf.mxu0
        %v2498 = vadd.f32 %v2385, %v2497
        %2499 = vmatmul.f32.gmra.mxu0 %v1649
        %v2500 = vpop.f32.mrf.mxu0
        %v2501 = vadd.f32 %v2388, %v2500
        %2502 = vmatmul.f32.gmra.mxu0 %v1657
        %v2503 = vpop.f32.mrf.mxu0
        %v2504 = vadd.f32 %v2391, %v2503
        %2505 = vmatmul.f32.gmra.mxu0 %v1665
        %v2506 = vpop.f32.mrf.mxu0
        %v2507 = vadd.f32 %v2394, %v2506
        %2508 = vmatmul.f32.gmra.mxu0 %v1673
        %v2509 = vpop.f32.mrf.mxu0
        %v2510 = vadd.f32 %v2397, %v2509
        %2511 = vmatmul.f32.gmra.mxu0 %v1681
        %v2512 = vpop.f32.mrf.mxu0
        %v2513 = vadd.f32 %v2400, %v2512
        %2514 = vmatmul.f32.gmra.mxu0 %v1689
        %v2515 = vpop.f32.mrf.mxu0
        %v2516 = vadd.f32 %v2403, %v2515
        %2517 = vmatmul.f32.gmra.mxu0 %v1697
        %v2518 = vpop.f32.mrf.mxu0
        %v2519 = vadd.f32 %v2406, %v2518
        %2520 = vmatmul.f32.gmra.mxu0 %v1705
        %v2521 = vpop.f32.mrf.mxu0
        %v2522 = vadd.f32 %v2409, %v2521
        %2523 = vmatmul.f32.gmra.mxu0 %v1713
        %v2524 = vpop.f32.mrf.mxu0
        %v2525 = vadd.f32 %v2412, %v2524
        %2526 = vmatmul.f32.gmra.mxu0 %v1721
        %v2527 = vpop.f32.mrf.mxu0
        %v2528 = vadd.f32 %v2415, %v2527
        %2529 = vdwg.mxu0
        %2530 = vmatpush.msra.mxu0 %v1835
        %2531 = vmatpush.msra.mxu0 %v1834
        %2532 = vmatpush.msra.mxu0 %v1833
        %2533 = vmatpush.msra.mxu0 %v1832
        %2534 = vmatpush.msra.mxu0 %v1831
        %2535 = vmatpush.msra.mxu0 %v1830
        %2536 = vmatpush.msra.mxu0 %v1829
        %2537 = vmatpush.msra.mxu0 %v1828
        %2538 = vmatpush.msra.mxu0 %v1827
        %2539 = vmatpush.msra.mxu0 %v1826
        %2540 = vmatpush.msra.mxu0 %v1825
        %2541 = vmatpush.msra.mxu0 %v1824
        %2542 = vmatpush.msra.mxu0 %v1823
        %2543 = vmatpush.msra.mxu0 %v1822
        %2544 = vmatpush.msra.mxu0 %v1821
        %2545 = vmatpush.msra.mxu0 %v1820
        %2546 = vmatmul.f32.gmra.mxu0 %v1474
        %v2547 = vpop.f32.mrf.mxu0
        %v2548 = vadd.f32 %v2435, %v2547
        %2549 = vmatmul.f32.gmra.mxu0 %v1482
        %v2550 = vpop.f32.mrf.mxu0
        %v2551 = vadd.f32 %v2438, %v2550
        %2552 = vmatmul.f32.gmra.mxu0 %v1490
        %v2553 = vpop.f32.mrf.mxu0
        %v2554 = vadd.f32 %v2441, %v2553
        %2555 = vmatmul.f32.gmra.mxu0 %v1498
        %v2556 = vpop.f32.mrf.mxu0
        %v2557 = vadd.f32 %v2444, %v2556
        %2558 = vmatmul.f32.gmra.mxu0 %v1506
        %v2559 = vpop.f32.mrf.mxu0
        %v2560 = vadd.f32 %v2447, %v2559
        %2561 = vmatmul.f32.gmra.mxu0 %v1514
        %v2562 = vpop.f32.mrf.mxu0
        %v2563 = vadd.f32 %v2450, %v2562
        %2564 = vmatmul.f32.gmra.mxu0 %v1522
        %v2565 = vpop.f32.mrf.mxu0
        %v2566 = vadd.f32 %v2453, %v2565
        %2567 = vmatmul.f32.gmra.mxu0 %v1530
        %v2568 = vpop.f32.mrf.mxu0
        %v2569 = vadd.f32 %v2456, %v2568
        %2570 = vmatmul.f32.gmra.mxu0 %v1538
        %v2571 = vpop.f32.mrf.mxu0
        %v2572 = vadd.f32 %v2459, %v2571
        %2573 = vmatmul.f32.gmra.mxu0 %v1546
        %v2574 = vpop.f32.mrf.mxu0
        %v2575 = vadd.f32 %v2462, %v2574
        %2576 = vmatmul.f32.gmra.mxu0 %v1554
        %v2577 = vpop.f32.mrf.mxu0
        %v2578 = vadd.f32 %v2465, %v2577
        %2579 = vmatmul.f32.gmra.mxu0 %v1562
        %v2580 = vpop.f32.mrf.mxu0
        %v2581 = vadd.f32 %v2468, %v2580
        %2582 = vmatmul.f32.gmra.mxu0 %v1570
        %v2583 = vpop.f32.mrf.mxu0
        %v2584 = vadd.f32 %v2471, %v2583
        %2585 = vmatmul.f32.gmra.mxu0 %v1578
        %v2586 = vpop.f32.mrf.mxu0
        %v2587 = vadd.f32 %v2474, %v2586
        %2588 = vmatmul.f32.gmra.mxu0 %v1586
        %v2589 = vpop.f32.mrf.mxu0
        %v2590 = vadd.f32 %v2477, %v2589
        %2591 = vmatmul.f32.gmra.mxu0 %v1594
        %v2592 = vpop.f32.mrf.mxu0
        %v2593 = vadd.f32 %v2480, %v2592
        %2594 = vmatmul.f32.gmra.mxu0 %v1602
        %v2595 = vpop.f32.mrf.mxu0
        %v2596 = vadd.f32 %v2483, %v2595
        %2597 = vmatmul.f32.gmra.mxu0 %v1610
        %v2598 = vpop.f32.mrf.mxu0
        %v2599 = vadd.f32 %v2486, %v2598
        %2600 = vmatmul.f32.gmra.mxu0 %v1618
        %v2601 = vpop.f32.mrf.mxu0
        %v2602 = vadd.f32 %v2489, %v2601
        %2603 = vmatmul.f32.gmra.mxu0 %v1626
        %v2604 = vpop.f32.mrf.mxu0
        %v2605 = vadd.f32 %v2492, %v2604
        %2606 = vmatmul.f32.gmra.mxu0 %v1634
        %v2607 = vpop.f32.mrf.mxu0
        %v2608 = vadd.f32 %v2495, %v2607
        %2609 = vmatmul.f32.gmra.mxu0 %v1642
        %v2610 = vpop.f32.mrf.mxu0
        %v2611 = vadd.f32 %v2498, %v2610
        %2612 = vmatmul.f32.gmra.mxu0 %v1650
        %v2613 = vpop.f32.mrf.mxu0
        %v2614 = vadd.f32 %v2501, %v2613
        %2615 = vmatmul.f32.gmra.mxu0 %v1658
        %v2616 = vpop.f32.mrf.mxu0
        %v2617 = vadd.f32 %v2504, %v2616
        %2618 = vmatmul.f32.gmra.mxu0 %v1666
        %v2619 = vpop.f32.mrf.mxu0
        %v2620 = vadd.f32 %v2507, %v2619
        %2621 = vmatmul.f32.gmra.mxu0 %v1674
        %v2622 = vpop.f32.mrf.mxu0
        %v2623 = vadd.f32 %v2510, %v2622
        %2624 = vmatmul.f32.gmra.mxu0 %v1682
        %v2625 = vpop.f32.mrf.mxu0
        %v2626 = vadd.f32 %v2513, %v2625
        %2627 = vmatmul.f32.gmra.mxu0 %v1690
        %v2628 = vpop.f32.mrf.mxu0
        %v2629 = vadd.f32 %v2516, %v2628
        %2630 = vmatmul.f32.gmra.mxu0 %v1698
        %v2631 = vpop.f32.mrf.mxu0
        %v2632 = vadd.f32 %v2519, %v2631
        %2633 = vmatmul.f32.gmra.mxu0 %v1706
        %v2634 = vpop.f32.mrf.mxu0
        %v2635 = vadd.f32 %v2522, %v2634
        %2636 = vmatmul.f32.gmra.mxu0 %v1714
        %v2637 = vpop.f32.mrf.mxu0
        %v2638 = vadd.f32 %v2525, %v2637
        %2639 = vmatmul.f32.gmra.mxu0 %v1722
        %v2640 = vpop.f32.mrf.mxu0
        %v2641 = vadd.f32 %v2528, %v2640
        %2642 = vdwg.mxu0
        %2643 = vmatpush.msra.mxu0 %v1851
        %2644 = vmatpush.msra.mxu0 %v1850
        %2645 = vmatpush.msra.mxu0 %v1849
        %2646 = vmatpush.msra.mxu0 %v1848
        %2647 = vmatpush.msra.mxu0 %v1847
        %2648 = vmatpush.msra.mxu0 %v1846
        %2649 = vmatpush.msra.mxu0 %v1845
        %2650 = vmatpush.msra.mxu0 %v1844
        %2651 = vmatpush.msra.mxu0 %v1843
        %2652 = vmatpush.msra.mxu0 %v1842
        %2653 = vmatpush.msra.mxu0 %v1841
        %2654 = vmatpush.msra.mxu0 %v1840
        %2655 = vmatpush.msra.mxu0 %v1839
        %2656 = vmatpush.msra.mxu0 %v1838
        %2657 = vmatpush.msra.mxu0 %v1837
        %2658 = vmatpush.msra.mxu0 %v1836
        %2659 = vmatmul.f32.gmra.mxu0 %v1475
        %v2660 = vpop.f32.mrf.mxu0
        %v2661 = vadd.f32 %v2548, %v2660
        %2662 = vmatmul.f32.gmra.mxu0 %v1483
        %v2663 = vpop.f32.mrf.mxu0
        %v2664 = vadd.f32 %v2551, %v2663
        %2665 = vmatmul.f32.gmra.mxu0 %v1491
        %v2666 = vpop.f32.mrf.mxu0
        %v2667 = vadd.f32 %v2554, %v2666
        %2668 = vmatmul.f32.gmra.mxu0 %v1499
        %v2669 = vpop.f32.mrf.mxu0
        %v2670 = vadd.f32 %v2557, %v2669
        %2671 = vmatmul.f32.gmra.mxu0 %v1507
        %v2672 = vpop.f32.mrf.mxu0
        %v2673 = vadd.f32 %v2560, %v2672
        %2674 = vmatmul.f32.gmra.mxu0 %v1515
        %v2675 = vpop.f32.mrf.mxu0
        %v2676 = vadd.f32 %v2563, %v2675
        %2677 = vmatmul.f32.gmra.mxu0 %v1523
        %v2678 = vpop.f32.mrf.mxu0
        %v2679 = vadd.f32 %v2566, %v2678
        %2680 = vmatmul.f32.gmra.mxu0 %v1531
        %v2681 = vpop.f32.mrf.mxu0
        %v2682 = vadd.f32 %v2569, %v2681
        %2683 = vmatmul.f32.gmra.mxu0 %v1539
        %v2684 = vpop.f32.mrf.mxu0
        %v2685 = vadd.f32 %v2572, %v2684
        %2686 = vmatmul.f32.gmra.mxu0 %v1547
        %v2687 = vpop.f32.mrf.mxu0
        %v2688 = vadd.f32 %v2575, %v2687
        %2689 = vmatmul.f32.gmra.mxu0 %v1555
        %v2690 = vpop.f32.mrf.mxu0
        %v2691 = vadd.f32 %v2578, %v2690
        %2692 = vmatmul.f32.gmra.mxu0 %v1563
        %v2693 = vpop.f32.mrf.mxu0
        %v2694 = vadd.f32 %v2581, %v2693
        %2695 = vmatmul.f32.gmra.mxu0 %v1571
        %v2696 = vpop.f32.mrf.mxu0
        %v2697 = vadd.f32 %v2584, %v2696
        %2698 = vmatmul.f32.gmra.mxu0 %v1579
        %v2699 = vpop.f32.mrf.mxu0
        %v2700 = vadd.f32 %v2587, %v2699
        %2701 = vmatmul.f32.gmra.mxu0 %v1587
        %v2702 = vpop.f32.mrf.mxu0
        %v2703 = vadd.f32 %v2590, %v2702
        %2704 = vmatmul.f32.gmra.mxu0 %v1595
        %v2705 = vpop.f32.mrf.mxu0
        %v2706 = vadd.f32 %v2593, %v2705
        %2707 = vmatmul.f32.gmra.mxu0 %v1603
        %v2708 = vpop.f32.mrf.mxu0
        %v2709 = vadd.f32 %v2596, %v2708
        %2710 = vmatmul.f32.gmra.mxu0 %v1611
        %v2711 = vpop.f32.mrf.mxu0
        %v2712 = vadd.f32 %v2599, %v2711
        %2713 = vmatmul.f32.gmra.mxu0 %v1619
        %v2714 = vpop.f32.mrf.mxu0
        %v2715 = vadd.f32 %v2602, %v2714
        %2716 = vmatmul.f32.gmra.mxu0 %v1627
        %v2717 = vpop.f32.mrf.mxu0
        %v2718 = vadd.f32 %v2605, %v2717
        %2719 = vmatmul.f32.gmra.mxu0 %v1635
        %v2720 = vpop.f32.mrf.mxu0
        %v2721 = vadd.f32 %v2608, %v2720
        %2722 = vmatmul.f32.gmra.mxu0 %v1643
        %v2723 = vpop.f32.mrf.mxu0
        %v2724 = vadd.f32 %v2611, %v2723
        %2725 = vmatmul.f32.gmra.mxu0 %v1651
        %v2726 = vpop.f32.mrf.mxu0
        %v2727 = vadd.f32 %v2614, %v2726
        %2728 = vmatmul.f32.gmra.mxu0 %v1659
        %v2729 = vpop.f32.mrf.mxu0
        %v2730 = vadd.f32 %v2617, %v2729
        %2731 = vmatmul.f32.gmra.mxu0 %v1667
        %v2732 = vpop.f32.mrf.mxu0
        %v2733 = vadd.f32 %v2620, %v2732
        %2734 = vmatmul.f32.gmra.mxu0 %v1675
        %v2735 = vpop.f32.mrf.mxu0
        %v2736 = vadd.f32 %v2623, %v2735
        %2737 = vmatmul.f32.gmra.mxu0 %v1683
        %v2738 = vpop.f32.mrf.mxu0
        %v2739 = vadd.f32 %v2626, %v2738
        %2740 = vmatmul.f32.gmra.mxu0 %v1691
        %v2741 = vpop.f32.mrf.mxu0
        %v2742 = vadd.f32 %v2629, %v2741
        %2743 = vmatmul.f32.gmra.mxu0 %v1699
        %v2744 = vpop.f32.mrf.mxu0
        %v2745 = vadd.f32 %v2632, %v2744
        %2746 = vmatmul.f32.gmra.mxu0 %v1707
        %v2747 = vpop.f32.mrf.mxu0
        %v2748 = vadd.f32 %v2635, %v2747
        %2749 = vmatmul.f32.gmra.mxu0 %v1715
        %v2750 = vpop.f32.mrf.mxu0
        %v2751 = vadd.f32 %v2638, %v2750
        %2752 = vmatmul.f32.gmra.mxu0 %v1723
        %v2753 = vpop.f32.mrf.mxu0
        %v2754 = vadd.f32 %v2641, %v2753
        %2755 = vdwg.mxu0
        %v2756 = vld [vmem:[%s208] sm:$0xff]
        %v2757 = vld [vmem:[%s208 + $0x8] sm:$0xff]
        %v2758 = vld [vmem:[%s208 + $0x10] sm:$0xff]
        %v2759 = vld [vmem:[%s208 + $0x18] sm:$0xff]
        %v2760 = vld [vmem:[%s208 + $0x20] sm:$0xff]
        %v2761 = vld [vmem:[%s208 + $0x28] sm:$0xff]
        %v2762 = vld [vmem:[%s208 + $0x30] sm:$0xff]
        %v2763 = vld [vmem:[%s208 + $0x38] sm:$0xff]
        %v2764 = vld [vmem:[%s208 + $0x40] sm:$0xff]
        %v2765 = vld [vmem:[%s208 + $0x48] sm:$0xff]
        %v2766 = vld [vmem:[%s208 + $0x50] sm:$0xff]
        %v2767 = vld [vmem:[%s208 + $0x58] sm:$0xff]
        %v2768 = vld [vmem:[%s208 + $0x60] sm:$0xff]
        %v2769 = vld [vmem:[%s208 + $0x68] sm:$0xff]
        %v2770 = vld [vmem:[%s208 + $0x70] sm:$0xff]
        %v2771 = vld [vmem:[%s208 + $0x78] sm:$0xff]
        %v2772 = vld [vmem:[%s208 + $0x80] sm:$0xff]
        %v2773 = vld [vmem:[%s208 + $0x88] sm:$0xff]
        %v2774 = vld [vmem:[%s208 + $0x90] sm:$0xff]
        %v2775 = vld [vmem:[%s208 + $0x98] sm:$0xff]
        %v2776 = vld [vmem:[%s208 + $0xa0] sm:$0xff]
        %v2777 = vld [vmem:[%s208 + $0xa8] sm:$0xff]
        %v2778 = vld [vmem:[%s208 + $0xb0] sm:$0xff]
        %v2779 = vld [vmem:[%s208 + $0xb8] sm:$0xff]
        %v2780 = vld [vmem:[%s208 + $0xc0] sm:$0xff]
        %v2781 = vld [vmem:[%s208 + $0xc8] sm:$0xff]
        %v2782 = vld [vmem:[%s208 + $0xd0] sm:$0xff]
        %v2783 = vld [vmem:[%s208 + $0xd8] sm:$0xff]
        %v2784 = vld [vmem:[%s208 + $0xe0] sm:$0xff]
        %v2785 = vld [vmem:[%s208 + $0xe8] sm:$0xff]
        %v2786 = vld [vmem:[%s208 + $0xf0] sm:$0xff]
        %v2787 = vld [vmem:[%s208 + $0xf8] sm:$0xff]
        %v2788 = vadd.f32 %v2756, %v2661
        %v2789 = vadd.f32 %v2757, %v2664
        %v2790 = vadd.f32 %v2758, %v2667
        %v2791 = vadd.f32 %v2759, %v2670
        %v2792 = vadd.f32 %v2760, %v2673
        %v2793 = vadd.f32 %v2761, %v2676
        %v2794 = vadd.f32 %v2762, %v2679
        %v2795 = vadd.f32 %v2763, %v2682
        %v2796 = vadd.f32 %v2764, %v2685
        %v2797 = vadd.f32 %v2765, %v2688
        %v2798 = vadd.f32 %v2766, %v2691
        %v2799 = vadd.f32 %v2767, %v2694
        %v2800 = vadd.f32 %v2768, %v2697
        %v2801 = vadd.f32 %v2769, %v2700
        %v2802 = vadd.f32 %v2770, %v2703
        %v2803 = vadd.f32 %v2771, %v2706
        %v2804 = vadd.f32 %v2772, %v2709
        %v2805 = vadd.f32 %v2773, %v2712
        %v2806 = vadd.f32 %v2774, %v2715
        %v2807 = vadd.f32 %v2775, %v2718
        %v2808 = vadd.f32 %v2776, %v2721
        %v2809 = vadd.f32 %v2777, %v2724
        %v2810 = vadd.f32 %v2778, %v2727
        %v2811 = vadd.f32 %v2779, %v2730
        %v2812 = vadd.f32 %v2780, %v2733
        %v2813 = vadd.f32 %v2781, %v2736
        %v2814 = vadd.f32 %v2782, %v2739
        %v2815 = vadd.f32 %v2783, %v2742
        %v2816 = vadd.f32 %v2784, %v2745
        %v2817 = vadd.f32 %v2785, %v2748
        %v2818 = vadd.f32 %v2786, %v2751
        %v2819 = vadd.f32 %v2787, %v2754
        %2820 = vst [vmem:[%s197] sm:$0xff] %v2788
        %2821 = vst [vmem:[%s197 + $0x8] sm:$0xff] %v2789
        %2822 = vst [vmem:[%s197 + $0x10] sm:$0xff] %v2790
        %2823 = vst [vmem:[%s197 + $0x18] sm:$0xff] %v2791
        %2824 = vst [vmem:[%s197 + $0x20] sm:$0xff] %v2792
        %2825 = vst [vmem:[%s197 + $0x28] sm:$0xff] %v2793
        %2826 = vst [vmem:[%s197 + $0x30] sm:$0xff] %v2794
        %2827 = vst [vmem:[%s197 + $0x38] sm:$0xff] %v2795
        %2828 = vst [vmem:[%s197 + $0x40] sm:$0xff] %v2796
        %2829 = vst [vmem:[%s197 + $0x48] sm:$0xff] %v2797
        %2830 = vst [vmem:[%s197 + $0x50] sm:$0xff] %v2798
        %2831 = vst [vmem:[%s197 + $0x58] sm:$0xff] %v2799
        %2832 = vst [vmem:[%s197 + $0x60] sm:$0xff] %v2800
        %2833 = vst [vmem:[%s197 + $0x68] sm:$0xff] %v2801
        %2834 = vst [vmem:[%s197 + $0x70] sm:$0xff] %v2802
        %2835 = vst [vmem:[%s197 + $0x78] sm:$0xff] %v2803
        %2836 = vst [vmem:[%s197 + $0x80] sm:$0xff] %v2804
        %2837 = vst [vmem:[%s197 + $0x88] sm:$0xff] %v2805
        %2838 = vst [vmem:[%s197 + $0x90] sm:$0xff] %v2806
        %2839 = vst [vmem:[%s197 + $0x98] sm:$0xff] %v2807
        %2840 = vst [vmem:[%s197 + $0xa0] sm:$0xff] %v2808
        %2841 = vst [vmem:[%s197 + $0xa8] sm:$0xff] %v2809
        %2842 = vst [vmem:[%s197 + $0xb0] sm:$0xff] %v2810
        %2843 = vst [vmem:[%s197 + $0xb8] sm:$0xff] %v2811
        %2844 = vst [vmem:[%s197 + $0xc0] sm:$0xff] %v2812
        %2845 = vst [vmem:[%s197 + $0xc8] sm:$0xff] %v2813
        %2846 = vst [vmem:[%s197 + $0xd0] sm:$0xff] %v2814
        %2847 = vst [vmem:[%s197 + $0xd8] sm:$0xff] %v2815
        %2848 = vst [vmem:[%s197 + $0xe0] sm:$0xff] %v2816
        %2849 = vst [vmem:[%s197 + $0xe8] sm:$0xff] %v2817
        %2850 = vst [vmem:[%s197 + $0xf0] sm:$0xff] %v2818
        %2851 = vst [vmem:[%s197 + $0xf8] sm:$0xff] %v2819
        %s2852 = sand.u32 %s99, 1
        %s2853 = scalar_lea.sflag [#allocation4], %s2852
        %s2854 = sand.u32 %s99, 1
        %s2855 = smul.addr %s2854, 256
        %s2856 = scalar_lea.vmem [#allocation5], %s2855
        // Predicated region
        $region37: #{tpu_custom_call.1} parent=31 // pred_check
          %p2857 = pneg %p109
        $region38: #{tpu_custom_call.1} parent=31 // pred_check_branch
          %2859 = sbr.rel (%p2857) target = $region40
        $region39: #{tpu_custom_call.1} parent=31 // pred_region
          %s2860 = smul.u32 32, %s18
          %2862 = vsyncadd %s2853, 0
          %s2863 = smul.addr %s2860, 8
          %s2864 = scalar_lea.hbm %s3, %s2863
          %s2865 = sshll.u32 %s2856, 4
          %s2866 = int_to_ptr.vmem [resolvable:$true] %s2865
          %s2867 = sshll.u32 %s2864, 4
          %s2868 = int_to_ptr.hbm [resolvable:$true] %s2867
          %2873 = dma.vmem_to_hbm [thread:$0]  %s2866, 4096, %s2868, %s2853, 128, 128, 8
        $region40: #{tpu_custom_call.1} parent=31 // pred_fallthru
          _
      $region32: #{tpu_custom_call.1} parent=5 // pred_fallthru
        _
      %p2874 = scmp.le.s32.totalorder 2, %s13
      // Predicated region
      $region41: #{tpu_custom_call.1} parent=5 // pred_check
        %p2875 = pneg %p2874
      $region42: #{tpu_custom_call.1} parent=5 // pred_check_branch
        %2877 = sbr.rel (%p2875) target = $region44
      $region43: #{tpu_custom_call.1} parent=5 // pred_region
        %s2878 = ssub.s32 %s13, 2
        // Predicated region
        $region45: #{tpu_custom_call.1} parent=43 // pred_check
          %p2879 = pneg %p115
        $region46: #{tpu_custom_call.1} parent=43 // pred_check_branch
          %2881 = sbr.rel (%p2879) target = $region48
        $region47: #{tpu_custom_call.1} parent=43 // pred_region
          %s2882 = sand.u32 %s100, 1
          %s2883 = scalar_lea.sflag [#allocation4], %s2882
          %s2884 = sand.u32 %s100, 1
          %s2885 = smul.addr %s2884, 256
          %s2886 = scalar_lea.vmem [#allocation5], %s2885
          %2888 = dma.done %s2883, 4096
        $region48: #{tpu_custom_call.1} parent=43 // pred_fallthru
          _
      $region44: #{tpu_custom_call.1} parent=5 // pred_fallthru
        _
    $region6: #{tpu_custom_call.1} parent=1 // loop_footer
      %s17 = sadd.s32 1, %s13
    $region7: #{tpu_custom_call.1} parent=1 // loop_footer_branch
      %12 = sbr.rel target = $region3
    $region8: #{tpu_custom_call.1} parent=1 // loop_exit
      _
    %2889 = vsyncpa [#allocation3], 1
    %s2890 = scalar_lea.sflag [#allocation3], 1
    %2891 = vsyncpa %s2890, 1
    %2892 = vsyncpa [#allocation4], 1
    %s2893 = scalar_lea.sflag [#allocation4], 1
    %2894 = vsyncpa %s2893, 1

</llo_original>
